<compile_context>
chip_gen: v7x
topology: tpu7x:2x2x1
jax: 0.10.0
libtpu: 0.0.40
codegen_flags: <defaults>
</compile_context>

<pallas_src>
import jax
import jax.numpy as jnp
from jax import lax
from jax.experimental import pallas as pl
from jax.experimental.pallas import tpu as pltpu

# ---- synthetic model config (small, deterministic) -------------------------
VOCAB = 64      # vocab size
D = 32          # hidden size
H = 4           # attention heads
DH = D // H     # head dim
HALF = DH // 2  # RoPE half dim
FFN = 64        # MLP inner dim
N_LAYERS = 2    # decoder layers
EPS = 1e-6
NEG = -1e9      # stand-in for torch.finfo(dtype).min


# ---------------------------- fused layer kernel -----------------------------

def _rms(x, w):
    # f32 rmsnorm (keep VPU/EUP math in f32: v5e has no bf16 VPU/EUP).
    var = jnp.mean(x * x, axis=-1, keepdims=True)
    return x * lax.rsqrt(var + EPS) * w


def _rope_pair(x, cos, sin):
    # x: [S, DH]; cos/sin: [S, HALF]  (matches HF LLaMA rotate-half convention)
    x1, x2 = x[:, :HALF], x[:, HALF:]
    return jnp.concatenate([x1 * cos - x2 * sin, x1 * sin + x2 * cos], axis=-1)


def _fused_layer_kernel(x_ref, m_ref, cos_ref, sin_ref,
                        anorm_ref, wqkv_ref, wo_ref,
                        mnorm_ref, wgu_ref, wd_ref, o_ref):
    """One full decoder layer for one batch element, fully VMEM-resident."""
    S = x_ref.shape[1]
    x = x_ref[0].astype(jnp.float32)            # [S, D]
    valid = m_ref[0]                            # [1, S] (1.0 keep, 0.0 pad)
    cos = cos_ref[0]                            # [S, HALF]
    sin = sin_ref[0]                            # [S, HALF]

    # additive mask built in-kernel: causal + left-padding, no HBM [S,S] tensor
    row = lax.broadcasted_iota(jnp.int32, (S, S), 0)
    col = lax.broadcasted_iota(jnp.int32, (S, S), 1)
    ok = (col <= row) & (valid > 0.5)           # [1,S] broadcasts over q rows
    add_mask = jnp.where(ok, jnp.float32(0.0), jnp.float32(NEG))

    # --- self-attention sub-block -------------------------------------------
    h = _rms(x, anorm_ref[...])
    qkv = jnp.dot(h, wqkv_ref[...], preferred_element_type=jnp.float32)  # [S,3D]
    q, k, v = qkv[:, :D], qkv[:, D:2 * D], qkv[:, 2 * D:]

    scale = 1.0 / (DH ** 0.5)
    heads = []
    for hh in range(H):                          # static unrolled head loop
        lo, hi = hh * DH, (hh + 1) * DH
        qh = _rope_pair(q[:, lo:hi], cos, sin)
        kh = _rope_pair(k[:, lo:hi], cos, sin)
        vh = v[:, lo:hi]
        s = jnp.dot(qh, kh.T, preferred_element_type=jnp.float32) * scale
        s = s + add_mask
        s = s - jnp.max(s, axis=-1, keepdims=True)
        p = jnp.exp(s)
        p = p * pl.reciprocal(jnp.sum(p, axis=-1, keepdims=True), approx=True)
        heads.append(jnp.dot(p, vh, preferred_element_type=jnp.float32))
    attn = jnp.concatenate(heads, axis=-1)       # [S, D]
    x = x + jnp.dot(attn, wo_ref[...], preferred_element_type=jnp.float32)

    # --- MLP sub-block (SwiGLU) ----------------------------------------------
    h2 = _rms(x, mnorm_ref[...])
    gu = jnp.dot(h2, wgu_ref[...], preferred_element_type=jnp.float32)   # [S,2F]
    g, u = gu[:, :FFN], gu[:, FFN:]
    f = (g * jax.nn.sigmoid(g)) * u
    x = x + jnp.dot(f, wd_ref[...], preferred_element_type=jnp.float32)

    o_ref[0] = x


def fused_decoder_layer(x, p, mask_f, cos, sin):
    """x: [B, S, D]; mask_f: [B, 1, S]; cos/sin: [B, S, HALF] -> [B, S, D]."""
    B, S, Dm = x.shape

    def full(shape):
        return pl.BlockSpec(shape, lambda b, _n=len(shape): (0,) * _n)

    return pl.pallas_call(
        _fused_layer_kernel,
        out_shape=jax.ShapeDtypeStruct((B, S, Dm), jnp.float32),
        grid=(B,),
        in_specs=[
            pl.BlockSpec((1, S, Dm), lambda b: (b, 0, 0)),     # x
            pl.BlockSpec((1, 1, S), lambda b: (b, 0, 0)),      # padding mask
            pl.BlockSpec((1, S, HALF), lambda b: (b, 0, 0)),   # cos
            pl.BlockSpec((1, S, HALF), lambda b: (b, 0, 0)),   # sin
            full((1, Dm)),           # attn_norm
            full((Dm, 3 * Dm)),      # wqkv (fused)
            full((Dm, Dm)),          # wo
            full((1, Dm)),           # mlp_norm
            full((Dm, 2 * FFN)),     # wgu (fused gate/up)
            full((FFN, Dm)),         # wd
        ],
        out_specs=pl.BlockSpec((1, S, Dm), lambda b: (b, 0, 0)),
        compiler_params=pltpu.CompilerParams(
            dimension_semantics=("parallel",)),
    )(x, mask_f, cos, sin,
      p["attn_norm"], p["wqkv"], p["wo"],
      p["mlp_norm"], p["wgu"], p["wd"])


# ------------------------------ glue (JAX) ------------------------------------

def multiprompteol_forward(params, input_ids, attention_mask, layer="1_2",
                           template_type="short", multi_template=False,
                           infer=True):
    """Forward of MultiPromptEOLEmbeddingsLLM (default single-template path)."""
    # TODO(synk): tokenizer decode/encode and *sent 0* template string surgery
    # have no Pallas equivalent; inputs are pre-tokenized, left-padded ids.
    if multi_template:
        # TODO(synk): multi-template quote-index attention-mask surgery depends
        # on tokenizer output; only the default single-template path is built.
        raise NotImplementedError("multi_template path not implemented")

    B, S = input_ids.shape
    # embed_tokens lookup (gather stays in glue)
    x = jnp.take(params["embed_tokens"], input_ids, axis=0).astype(jnp.float32)

    # padding mask [B, 1, S]; causal part is generated inside the kernel
    mask_f = attention_mask.astype(jnp.float32)[:, None, :]

    # left-padding aware positions (HF convention) -> RoPE angles [B, S, HALF]
    positions = jnp.clip(jnp.cumsum(attention_mask, axis=1) - 1, 0, None)
    positions = positions.astype(jnp.float32)
    freqs = 1.0 / (10000.0 ** (jnp.arange(HALF, dtype=jnp.float32) / HALF))
    angles = positions[:, :, None] * freqs[None, None, :]
    cos = jnp.cos(angles)
    sin = jnp.sin(angles)

    # forward_hook semantics: collect outputs of layers named in `layer`
    # (1-indexed, "_"-separated) and mean over them.  Since the final result
    # only reads position -1, keep only h[:, -1, :] per selected layer.
    selected = {int(s) - 1 for s in layer.split("_")}
    collected = []
    h = x
    for li, lp in enumerate(params["layers"]):
        h = fused_decoder_layer(h, lp, mask_f, cos, sin)
        if li in selected:
            collected.append(h[:, -1, :])                      # [B, D]
    return jnp.mean(jnp.stack(collected, axis=0), axis=0)      # [B, D]


def init_params(key):
    def w(k, shape, scale=0.05):
        return (scale * jax.random.normal(k, shape)).astype(jnp.float32)

    ks = jax.random.split(key, 2 + N_LAYERS)
    params = {
        "embed_tokens": w(ks[0], (VOCAB, D), 0.02),
        "lm_head": w(ks[1], (D, VOCAB), 0.02),   # present in __init__, unused in forward
        "layers": [],
    }
    for li in range(N_LAYERS):
        lk = jax.random.split(ks[2 + li], 7)
        wq, wk, wv = w(lk[0], (D, D)), w(lk[1], (D, D)), w(lk[2], (D, D))
        wg, wu = w(lk[4], (D, FFN)), w(lk[5], (D, FFN))
        params["layers"].append({
            "attn_norm": jnp.ones((1, D), jnp.float32),
            "mlp_norm": jnp.ones((1, D), jnp.float32),
            "wqkv": jnp.concatenate([wq, wk, wv], axis=1),     # [D, 3D] fused
            "wo": w(lk[3], (D, D)),
            "wgu": jnp.concatenate([wg, wu], axis=1),          # [D, 2*FFN] fused
            "wd": w(lk[6], (FFN, D)),
        })
    return params


if __name__ == "__main__":
    key = jax.random.PRNGKey(0)
    pkey, ikey = jax.random.split(key)
    params = init_params(pkey)

    B, S = 2, 8
    input_ids = jax.random.randint(ikey, (B, S), 1, VOCAB).astype(jnp.int32)
    # simulate left padding (pad_token_id = 0, padding_side = 'left')
    input_ids = input_ids.at[1, :2].set(0)
    attention_mask = (input_ids != 0).astype(jnp.int32)

    out = multiprompteol_forward(params, input_ids, attention_mask, layer="1_2")
    out = jax.block_until_ready(out)
    assert out.shape == (B, D) and out.dtype == jnp.float32
    assert bool(jnp.all(jnp.isfinite(out)))
    print("KERNEL_OK")
</pallas_src>

<mosaic_0001>
module attributes {stable_mosaic.version = 11 : i64} {
  func.func @_fused_layer_kernel(%arg0: i32, %arg1: memref<1x8x32xf32, #tpu.memory_space<vmem>>, %arg2: memref<1x1x8xf32, #tpu.memory_space<vmem>>, %arg3: memref<1x8x4xf32, #tpu.memory_space<vmem>>, %arg4: memref<1x8x4xf32, #tpu.memory_space<vmem>>, %arg5: memref<1x32xf32, #tpu.memory_space<vmem>>, %arg6: memref<32x96xf32, #tpu.memory_space<vmem>>, %arg7: memref<32x32xf32, #tpu.memory_space<vmem>>, %arg8: memref<1x32xf32, #tpu.memory_space<vmem>>, %arg9: memref<32x128xf32, #tpu.memory_space<vmem>>, %arg10: memref<64x32xf32, #tpu.memory_space<vmem>>, %arg11: memref<1x8x32xf32, #tpu.memory_space<vmem>>) attributes {dimension_semantics = [#tpu.dimension_semantics<parallel>], iteration_bounds = array<i64: 2>, scalar_prefetch = 0 : i64, scratch_operands = 0 : i64, tpu.core_type = #tpu.core_type<tc>, window_params = [{transform_indices = @transform_0, window_bounds = array<i64: 1, 8, 32>}, {transform_indices = @transform_1, window_bounds = array<i64: 1, 1, 8>}, {transform_indices = @transform_2, window_bounds = array<i64: 1, 8, 4>}, {transform_indices = @transform_3, window_bounds = array<i64: 1, 8, 4>}, {pipeline_mode = #tpu.pipeline_mode<synchronous>, transform_indices = @transform_4, window_bounds = array<i64: 1, 32>}, {pipeline_mode = #tpu.pipeline_mode<synchronous>, transform_indices = @transform_5, window_bounds = array<i64: 32, 96>}, {pipeline_mode = #tpu.pipeline_mode<synchronous>, transform_indices = @transform_6, window_bounds = array<i64: 32, 32>}, {pipeline_mode = #tpu.pipeline_mode<synchronous>, transform_indices = @transform_7, window_bounds = array<i64: 1, 32>}, {pipeline_mode = #tpu.pipeline_mode<synchronous>, transform_indices = @transform_8, window_bounds = array<i64: 32, 128>}, {pipeline_mode = #tpu.pipeline_mode<synchronous>, transform_indices = @transform_9, window_bounds = array<i64: 64, 32>}, {transform_indices = @transform_10, window_bounds = array<i64: 1, 8, 32>}]} {
    %c0 = arith.constant 0 : index
    %c0_0 = arith.constant 0 : index
    %c0_1 = arith.constant 0 : index
    %0 = vector.load %arg1[%c0, %c0_0, %c0_1] : memref<1x8x32xf32, #tpu.memory_space<vmem>>, vector<1x8x32xf32>
    %1 = vector.shape_cast %0 : vector<1x8x32xf32> to vector<8x32xf32>
    %c0_2 = arith.constant 0 : index
    %c0_3 = arith.constant 0 : index
    %c0_4 = arith.constant 0 : index
    %2 = vector.load %arg2[%c0_2, %c0_3, %c0_4] : memref<1x1x8xf32, #tpu.memory_space<vmem>>, vector<1x1x8xf32>
    %3 = vector.shape_cast %2 : vector<1x1x8xf32> to vector<1x8xf32>
    %c0_5 = arith.constant 0 : index
    %c0_6 = arith.constant 0 : index
    %c0_7 = arith.constant 0 : index
    %4 = vector.load %arg3[%c0_5, %c0_6, %c0_7] : memref<1x8x4xf32, #tpu.memory_space<vmem>>, vector<1x8x4xf32>
    %5 = vector.shape_cast %4 : vector<1x8x4xf32> to vector<8x4xf32>
    %c0_8 = arith.constant 0 : index
    %c0_9 = arith.constant 0 : index
    %c0_10 = arith.constant 0 : index
    %6 = vector.load %arg4[%c0_8, %c0_9, %c0_10] : memref<1x8x4xf32, #tpu.memory_space<vmem>>, vector<1x8x4xf32>
    %7 = vector.shape_cast %6 : vector<1x8x4xf32> to vector<8x4xf32>
    %8 = tpu.iota {dimensions = array<i32: 0>} : vector<8x8xi32>
    %9 = tpu.iota {dimensions = array<i32: 1>} : vector<8x8xi32>
    %10 = arith.cmpi sle, %9, %8 : vector<8x8xi32>
    %cst = arith.constant 5.000000e-01 : f32
    %11 = vector.broadcast %cst : f32 to vector<1x8xf32>
    %12 = arith.cmpf ogt, %3, %11 : vector<1x8xf32>
    %13 = vector.broadcast %12 : vector<1x8xi1> to vector<8x8xi1>
    %14 = arith.andi %10, %13 : vector<8x8xi1>
    %cst_11 = arith.constant 0.000000e+00 : f32
    %cst_12 = arith.constant -1.000000e+09 : f32
    %15 = vector.broadcast %cst_11 : f32 to vector<8x8xf32>
    %16 = vector.broadcast %cst_12 : f32 to vector<8x8xf32>
    %17 = arith.select %14, %15, %16 : vector<8x8xi1>, vector<8x8xf32>
    %c0_13 = arith.constant 0 : index
    %c0_14 = arith.constant 0 : index
    %18 = vector.load %arg5[%c0_13, %c0_14] : memref<1x32xf32, #tpu.memory_space<vmem>>, vector<1x32xf32>
    %19 = arith.mulf %1, %1 : vector<8x32xf32>
    %cst_15 = arith.constant dense<0.000000e+00> : vector<8xf32>
    %20 = vector.multi_reduction <add>, %19, %cst_15 [1] : vector<8x32xf32> to vector<8xf32>
    %21 = vector.shape_cast %20 : vector<8xf32> to vector<8x1xf32>
    %cst_16 = arith.constant 3.200000e+01 : f32
    %22 = vector.broadcast %cst_16 : f32 to vector<8x1xf32>
    %23 = arith.divf %21, %22 : vector<8x1xf32>
    %cst_17 = arith.constant 9.99999997E-7 : f32
    %24 = vector.broadcast %cst_17 : f32 to vector<8x1xf32>
    %25 = arith.addf %23, %24 : vector<8x1xf32>
    %26 = math.rsqrt %25 : vector<8x1xf32>
    %27 = vector.broadcast %26 : vector<8x1xf32> to vector<8x32xf32>
    %28 = arith.mulf %1, %27 : vector<8x32xf32>
    %29 = vector.broadcast %18 : vector<1x32xf32> to vector<8x32xf32>
    %30 = arith.mulf %28, %29 : vector<8x32xf32>
    %c0_18 = arith.constant 0 : index
    %c0_19 = arith.constant 0 : index
    %31 = vector.load %arg6[%c0_18, %c0_19] : memref<32x96xf32, #tpu.memory_space<vmem>>, vector<32x96xf32>
    %cst_20 = arith.constant dense<0.000000e+00> : vector<8x96xf32>
    %32 = tpu.matmul %30, %31, %cst_20 {dimension_numbers = #tpu.dot_dimension_numbers<[1], [0], [0], [1], [0, 0, 1, 1], [], []>} : vector<8x32xf32>, vector<32x96xf32>, vector<8x96xf32> -> vector<8x96xf32>
    %33 = vector.extract_strided_slice %32 {offsets = [0, 0], sizes = [8, 32], strides = [1, 1]} : vector<8x96xf32> to vector<8x32xf32>
    %34 = vector.extract_strided_slice %32 {offsets = [0, 32], sizes = [8, 32], strides = [1, 1]} : vector<8x96xf32> to vector<8x32xf32>
    %35 = vector.extract_strided_slice %32 {offsets = [0, 64], sizes = [8, 32], strides = [1, 1]} : vector<8x96xf32> to vector<8x32xf32>
    %36 = vector.extract_strided_slice %33 {offsets = [0, 0], sizes = [8, 8], strides = [1, 1]} : vector<8x32xf32> to vector<8x8xf32>
    %37 = vector.extract_strided_slice %36 {offsets = [0, 0], sizes = [8, 4], strides = [1, 1]} : vector<8x8xf32> to vector<8x4xf32>
    %38 = vector.extract_strided_slice %36 {offsets = [0, 4], sizes = [8, 4], strides = [1, 1]} : vector<8x8xf32> to vector<8x4xf32>
    %39 = arith.mulf %37, %5 : vector<8x4xf32>
    %40 = arith.mulf %38, %7 : vector<8x4xf32>
    %41 = arith.subf %39, %40 : vector<8x4xf32>
    %42 = arith.mulf %37, %7 : vector<8x4xf32>
    %43 = arith.mulf %38, %5 : vector<8x4xf32>
    %44 = arith.addf %42, %43 : vector<8x4xf32>
    %45 = tpu.concatenate %41, %44 in 1 : vector<8x4xf32>, vector<8x4xf32> -> vector<8x8xf32>
    %46 = vector.extract_strided_slice %34 {offsets = [0, 0], sizes = [8, 8], strides = [1, 1]} : vector<8x32xf32> to vector<8x8xf32>
    %47 = vector.extract_strided_slice %46 {offsets = [0, 0], sizes = [8, 4], strides = [1, 1]} : vector<8x8xf32> to vector<8x4xf32>
    %48 = vector.extract_strided_slice %46 {offsets = [0, 4], sizes = [8, 4], strides = [1, 1]} : vector<8x8xf32> to vector<8x4xf32>
    %49 = arith.mulf %47, %5 : vector<8x4xf32>
    %50 = arith.mulf %48, %7 : vector<8x4xf32>
    %51 = arith.subf %49, %50 : vector<8x4xf32>
    %52 = arith.mulf %47, %7 : vector<8x4xf32>
    %53 = arith.mulf %48, %5 : vector<8x4xf32>
    %54 = arith.addf %52, %53 : vector<8x4xf32>
    %55 = tpu.concatenate %51, %54 in 1 : vector<8x4xf32>, vector<8x4xf32> -> vector<8x8xf32>
    %56 = vector.extract_strided_slice %35 {offsets = [0, 0], sizes = [8, 8], strides = [1, 1]} : vector<8x32xf32> to vector<8x8xf32>
    %57 = tpu.transpose %55, [1, 0] : vector<8x8xf32> -> vector<8x8xf32>
    %cst_21 = arith.constant dense<0.000000e+00> : vector<8x8xf32>
    %58 = tpu.matmul %45, %57, %cst_21 {dimension_numbers = #tpu.dot_dimension_numbers<[1], [0], [0], [1], [0, 0, 1, 1], [], []>} : vector<8x8xf32>, vector<8x8xf32>, vector<8x8xf32> -> vector<8x8xf32>
    %cst_22 = arith.constant 0.353553385 : f32
    %59 = vector.broadcast %cst_22 : f32 to vector<8x8xf32>
    %60 = arith.mulf %58, %59 : vector<8x8xf32>
    %61 = arith.addf %60, %17 : vector<8x8xf32>
    %cst_23 = arith.constant dense<0xFF800000> : vector<8xf32>
    %62 = vector.multi_reduction <maximumf>, %61, %cst_23 [1] : vector<8x8xf32> to vector<8xf32>
    %63 = vector.shape_cast %62 : vector<8xf32> to vector<8x1xf32>
    %64 = vector.broadcast %63 : vector<8x1xf32> to vector<8x8xf32>
    %65 = arith.subf %61, %64 : vector<8x8xf32>
    %66 = math.exp %65 : vector<8x8xf32>
    %cst_24 = arith.constant dense<0.000000e+00> : vector<8xf32>
    %67 = vector.multi_reduction <add>, %66, %cst_24 [1] : vector<8x8xf32> to vector<8xf32>
    %68 = vector.shape_cast %67 : vector<8xf32> to vector<8x1xf32>
    %69 = tpu.reciprocal %68 {approx = true} : vector<8x1xf32> -> vector<8x1xf32>
    %70 = vector.broadcast %69 : vector<8x1xf32> to vector<8x8xf32>
    %71 = arith.mulf %66, %70 : vector<8x8xf32>
    %cst_25 = arith.constant dense<0.000000e+00> : vector<8x8xf32>
    %72 = tpu.matmul %71, %56, %cst_25 {dimension_numbers = #tpu.dot_dimension_numbers<[1], [0], [0], [1], [0, 0, 1, 1], [], []>} : vector<8x8xf32>, vector<8x8xf32>, vector<8x8xf32> -> vector<8x8xf32>
    %73 = vector.extract_strided_slice %33 {offsets = [0, 8], sizes = [8, 8], strides = [1, 1]} : vector<8x32xf32> to vector<8x8xf32>
    %74 = vector.extract_strided_slice %73 {offsets = [0, 0], sizes = [8, 4], strides = [1, 1]} : vector<8x8xf32> to vector<8x4xf32>
    %75 = vector.extract_strided_slice %73 {offsets = [0, 4], sizes = [8, 4], strides = [1, 1]} : vector<8x8xf32> to vector<8x4xf32>
    %76 = arith.mulf %74, %5 : vector<8x4xf32>
    %77 = arith.mulf %75, %7 : vector<8x4xf32>
    %78 = arith.subf %76, %77 : vector<8x4xf32>
    %79 = arith.mulf %74, %7 : vector<8x4xf32>
    %80 = arith.mulf %75, %5 : vector<8x4xf32>
    %81 = arith.addf %79, %80 : vector<8x4xf32>
    %82 = tpu.concatenate %78, %81 in 1 : vector<8x4xf32>, vector<8x4xf32> -> vector<8x8xf32>
    %83 = vector.extract_strided_slice %34 {offsets = [0, 8], sizes = [8, 8], strides = [1, 1]} : vector<8x32xf32> to vector<8x8xf32>
    %84 = vector.extract_strided_slice %83 {offsets = [0, 0], sizes = [8, 4], strides = [1, 1]} : vector<8x8xf32> to vector<8x4xf32>
    %85 = vector.extract_strided_slice %83 {offsets = [0, 4], sizes = [8, 4], strides = [1, 1]} : vector<8x8xf32> to vector<8x4xf32>
    %86 = arith.mulf %84, %5 : vector<8x4xf32>
    %87 = arith.mulf %85, %7 : vector<8x4xf32>
    %88 = arith.subf %86, %87 : vector<8x4xf32>
    %89 = arith.mulf %84, %7 : vector<8x4xf32>
    %90 = arith.mulf %85, %5 : vector<8x4xf32>
    %91 = arith.addf %89, %90 : vector<8x4xf32>
    %92 = tpu.concatenate %88, %91 in 1 : vector<8x4xf32>, vector<8x4xf32> -> vector<8x8xf32>
    %93 = vector.extract_strided_slice %35 {offsets = [0, 8], sizes = [8, 8], strides = [1, 1]} : vector<8x32xf32> to vector<8x8xf32>
    %94 = tpu.transpose %92, [1, 0] : vector<8x8xf32> -> vector<8x8xf32>
    %cst_26 = arith.constant dense<0.000000e+00> : vector<8x8xf32>
    %95 = tpu.matmul %82, %94, %cst_26 {dimension_numbers = #tpu.dot_dimension_numbers<[1], [0], [0], [1], [0, 0, 1, 1], [], []>} : vector<8x8xf32>, vector<8x8xf32>, vector<8x8xf32> -> vector<8x8xf32>
    %cst_27 = arith.constant 0.353553385 : f32
    %96 = vector.broadcast %cst_27 : f32 to vector<8x8xf32>
    %97 = arith.mulf %95, %96 : vector<8x8xf32>
    %98 = arith.addf %97, %17 : vector<8x8xf32>
    %cst_28 = arith.constant dense<0xFF800000> : vector<8xf32>
    %99 = vector.multi_reduction <maximumf>, %98, %cst_28 [1] : vector<8x8xf32> to vector<8xf32>
    %100 = vector.shape_cast %99 : vector<8xf32> to vector<8x1xf32>
    %101 = vector.broadcast %100 : vector<8x1xf32> to vector<8x8xf32>
    %102 = arith.subf %98, %101 : vector<8x8xf32>
    %103 = math.exp %102 : vector<8x8xf32>
    %cst_29 = arith.constant dense<0.000000e+00> : vector<8xf32>
    %104 = vector.multi_reduction <add>, %103, %cst_29 [1] : vector<8x8xf32> to vector<8xf32>
    %105 = vector.shape_cast %104 : vector<8xf32> to vector<8x1xf32>
    %106 = tpu.reciprocal %105 {approx = true} : vector<8x1xf32> -> vector<8x1xf32>
    %107 = vector.broadcast %106 : vector<8x1xf32> to vector<8x8xf32>
    %108 = arith.mulf %103, %107 : vector<8x8xf32>
    %cst_30 = arith.constant dense<0.000000e+00> : vector<8x8xf32>
    %109 = tpu.matmul %108, %93, %cst_30 {dimension_numbers = #tpu.dot_dimension_numbers<[1], [0], [0], [1], [0, 0, 1, 1], [], []>} : vector<8x8xf32>, vector<8x8xf32>, vector<8x8xf32> -> vector<8x8xf32>
    %110 = vector.extract_strided_slice %33 {offsets = [0, 16], sizes = [8, 8], strides = [1, 1]} : vector<8x32xf32> to vector<8x8xf32>
    %111 = vector.extract_strided_slice %110 {offsets = [0, 0], sizes = [8, 4], strides = [1, 1]} : vector<8x8xf32> to vector<8x4xf32>
    %112 = vector.extract_strided_slice %110 {offsets = [0, 4], sizes = [8, 4], strides = [1, 1]} : vector<8x8xf32> to vector<8x4xf32>
    %113 = arith.mulf %111, %5 : vector<8x4xf32>
    %114 = arith.mulf %112, %7 : vector<8x4xf32>
    %115 = arith.subf %113, %114 : vector<8x4xf32>
    %116 = arith.mulf %111, %7 : vector<8x4xf32>
    %117 = arith.mulf %112, %5 : vector<8x4xf32>
    %118 = arith.addf %116, %117 : vector<8x4xf32>
    %119 = tpu.concatenate %115, %118 in 1 : vector<8x4xf32>, vector<8x4xf32> -> vector<8x8xf32>
    %120 = vector.extract_strided_slice %34 {offsets = [0, 16], sizes = [8, 8], strides = [1, 1]} : vector<8x32xf32> to vector<8x8xf32>
    %121 = vector.extract_strided_slice %120 {offsets = [0, 0], sizes = [8, 4], strides = [1, 1]} : vector<8x8xf32> to vector<8x4xf32>
    %122 = vector.extract_strided_slice %120 {offsets = [0, 4], sizes = [8, 4], strides = [1, 1]} : vector<8x8xf32> to vector<8x4xf32>
    %123 = arith.mulf %121, %5 : vector<8x4xf32>
    %124 = arith.mulf %122, %7 : vector<8x4xf32>
    %125 = arith.subf %123, %124 : vector<8x4xf32>
    %126 = arith.mulf %121, %7 : vector<8x4xf32>
    %127 = arith.mulf %122, %5 : vector<8x4xf32>
    %128 = arith.addf %126, %127 : vector<8x4xf32>
    %129 = tpu.concatenate %125, %128 in 1 : vector<8x4xf32>, vector<8x4xf32> -> vector<8x8xf32>
    %130 = vector.extract_strided_slice %35 {offsets = [0, 16], sizes = [8, 8], strides = [1, 1]} : vector<8x32xf32> to vector<8x8xf32>
    %131 = tpu.transpose %129, [1, 0] : vector<8x8xf32> -> vector<8x8xf32>
    %cst_31 = arith.constant dense<0.000000e+00> : vector<8x8xf32>
    %132 = tpu.matmul %119, %131, %cst_31 {dimension_numbers = #tpu.dot_dimension_numbers<[1], [0], [0], [1], [0, 0, 1, 1], [], []>} : vector<8x8xf32>, vector<8x8xf32>, vector<8x8xf32> -> vector<8x8xf32>
    %cst_32 = arith.constant 0.353553385 : f32
    %133 = vector.broadcast %cst_32 : f32 to vector<8x8xf32>
    %134 = arith.mulf %132, %133 : vector<8x8xf32>
    %135 = arith.addf %134, %17 : vector<8x8xf32>
    %cst_33 = arith.constant dense<0xFF800000> : vector<8xf32>
    %136 = vector.multi_reduction <maximumf>, %135, %cst_33 [1] : vector<8x8xf32> to vector<8xf32>
    %137 = vector.shape_cast %136 : vector<8xf32> to vector<8x1xf32>
    %138 = vector.broadcast %137 : vector<8x1xf32> to vector<8x8xf32>
    %139 = arith.subf %135, %138 : vector<8x8xf32>
    %140 = math.exp %139 : vector<8x8xf32>
    %cst_34 = arith.constant dense<0.000000e+00> : vector<8xf32>
    %141 = vector.multi_reduction <add>, %140, %cst_34 [1] : vector<8x8xf32> to vector<8xf32>
    %142 = vector.shape_cast %141 : vector<8xf32> to vector<8x1xf32>
    %143 = tpu.reciprocal %142 {approx = true} : vector<8x1xf32> -> vector<8x1xf32>
    %144 = vector.broadcast %143 : vector<8x1xf32> to vector<8x8xf32>
    %145 = arith.mulf %140, %144 : vector<8x8xf32>
    %cst_35 = arith.constant dense<0.000000e+00> : vector<8x8xf32>
    %146 = tpu.matmul %145, %130, %cst_35 {dimension_numbers = #tpu.dot_dimension_numbers<[1], [0], [0], [1], [0, 0, 1, 1], [], []>} : vector<8x8xf32>, vector<8x8xf32>, vector<8x8xf32> -> vector<8x8xf32>
    %147 = vector.extract_strided_slice %33 {offsets = [0, 24], sizes = [8, 8], strides = [1, 1]} : vector<8x32xf32> to vector<8x8xf32>
    %148 = vector.extract_strided_slice %147 {offsets = [0, 0], sizes = [8, 4], strides = [1, 1]} : vector<8x8xf32> to vector<8x4xf32>
    %149 = vector.extract_strided_slice %147 {offsets = [0, 4], sizes = [8, 4], strides = [1, 1]} : vector<8x8xf32> to vector<8x4xf32>
    %150 = arith.mulf %148, %5 : vector<8x4xf32>
    %151 = arith.mulf %149, %7 : vector<8x4xf32>
    %152 = arith.subf %150, %151 : vector<8x4xf32>
    %153 = arith.mulf %148, %7 : vector<8x4xf32>
    %154 = arith.mulf %149, %5 : vector<8x4xf32>
    %155 = arith.addf %153, %154 : vector<8x4xf32>
    %156 = tpu.concatenate %152, %155 in 1 : vector<8x4xf32>, vector<8x4xf32> -> vector<8x8xf32>
    %157 = vector.extract_strided_slice %34 {offsets = [0, 24], sizes = [8, 8], strides = [1, 1]} : vector<8x32xf32> to vector<8x8xf32>
    %158 = vector.extract_strided_slice %157 {offsets = [0, 0], sizes = [8, 4], strides = [1, 1]} : vector<8x8xf32> to vector<8x4xf32>
    %159 = vector.extract_strided_slice %157 {offsets = [0, 4], sizes = [8, 4], strides = [1, 1]} : vector<8x8xf32> to vector<8x4xf32>
    %160 = arith.mulf %158, %5 : vector<8x4xf32>
    %161 = arith.mulf %159, %7 : vector<8x4xf32>
    %162 = arith.subf %160, %161 : vector<8x4xf32>
    %163 = arith.mulf %158, %7 : vector<8x4xf32>
    %164 = arith.mulf %159, %5 : vector<8x4xf32>
    %165 = arith.addf %163, %164 : vector<8x4xf32>
    %166 = tpu.concatenate %162, %165 in 1 : vector<8x4xf32>, vector<8x4xf32> -> vector<8x8xf32>
    %167 = vector.extract_strided_slice %35 {offsets = [0, 24], sizes = [8, 8], strides = [1, 1]} : vector<8x32xf32> to vector<8x8xf32>
    %168 = tpu.transpose %166, [1, 0] : vector<8x8xf32> -> vector<8x8xf32>
    %cst_36 = arith.constant dense<0.000000e+00> : vector<8x8xf32>
    %169 = tpu.matmul %156, %168, %cst_36 {dimension_numbers = #tpu.dot_dimension_numbers<[1], [0], [0], [1], [0, 0, 1, 1], [], []>} : vector<8x8xf32>, vector<8x8xf32>, vector<8x8xf32> -> vector<8x8xf32>
    %cst_37 = arith.constant 0.353553385 : f32
    %170 = vector.broadcast %cst_37 : f32 to vector<8x8xf32>
    %171 = arith.mulf %169, %170 : vector<8x8xf32>
    %172 = arith.addf %171, %17 : vector<8x8xf32>
    %cst_38 = arith.constant dense<0xFF800000> : vector<8xf32>
    %173 = vector.multi_reduction <maximumf>, %172, %cst_38 [1] : vector<8x8xf32> to vector<8xf32>
    %174 = vector.shape_cast %173 : vector<8xf32> to vector<8x1xf32>
    %175 = vector.broadcast %174 : vector<8x1xf32> to vector<8x8xf32>
    %176 = arith.subf %172, %175 : vector<8x8xf32>
    %177 = math.exp %176 : vector<8x8xf32>
    %cst_39 = arith.constant dense<0.000000e+00> : vector<8xf32>
    %178 = vector.multi_reduction <add>, %177, %cst_39 [1] : vector<8x8xf32> to vector<8xf32>
    %179 = vector.shape_cast %178 : vector<8xf32> to vector<8x1xf32>
    %180 = tpu.reciprocal %179 {approx = true} : vector<8x1xf32> -> vector<8x1xf32>
    %181 = vector.broadcast %180 : vector<8x1xf32> to vector<8x8xf32>
    %182 = arith.mulf %177, %181 : vector<8x8xf32>
    %cst_40 = arith.constant dense<0.000000e+00> : vector<8x8xf32>
    %183 = tpu.matmul %182, %167, %cst_40 {dimension_numbers = #tpu.dot_dimension_numbers<[1], [0], [0], [1], [0, 0, 1, 1], [], []>} : vector<8x8xf32>, vector<8x8xf32>, vector<8x8xf32> -> vector<8x8xf32>
    %184 = tpu.concatenate %72, %109, %146, %183 in 1 : vector<8x8xf32>, vector<8x8xf32>, vector<8x8xf32>, vector<8x8xf32> -> vector<8x32xf32>
    %c0_41 = arith.constant 0 : index
    %c0_42 = arith.constant 0 : index
    %185 = vector.load %arg7[%c0_41, %c0_42] : memref<32x32xf32, #tpu.memory_space<vmem>>, vector<32x32xf32>
    %cst_43 = arith.constant dense<0.000000e+00> : vector<8x32xf32>
    %186 = tpu.matmul %184, %185, %cst_43 {dimension_numbers = #tpu.dot_dimension_numbers<[1], [0], [0], [1], [0, 0, 1, 1], [], []>} : vector<8x32xf32>, vector<32x32xf32>, vector<8x32xf32> -> vector<8x32xf32>
    %187 = arith.addf %1, %186 : vector<8x32xf32>
    %c0_44 = arith.constant 0 : index
    %c0_45 = arith.constant 0 : index
    %188 = vector.load %arg8[%c0_44, %c0_45] : memref<1x32xf32, #tpu.memory_space<vmem>>, vector<1x32xf32>
    %189 = arith.mulf %187, %187 : vector<8x32xf32>
    %cst_46 = arith.constant dense<0.000000e+00> : vector<8xf32>
    %190 = vector.multi_reduction <add>, %189, %cst_46 [1] : vector<8x32xf32> to vector<8xf32>
    %191 = vector.shape_cast %190 : vector<8xf32> to vector<8x1xf32>
    %cst_47 = arith.constant 3.200000e+01 : f32
    %192 = vector.broadcast %cst_47 : f32 to vector<8x1xf32>
    %193 = arith.divf %191, %192 : vector<8x1xf32>
    %cst_48 = arith.constant 9.99999997E-7 : f32
    %194 = vector.broadcast %cst_48 : f32 to vector<8x1xf32>
    %195 = arith.addf %193, %194 : vector<8x1xf32>
    %196 = math.rsqrt %195 : vector<8x1xf32>
    %197 = vector.broadcast %196 : vector<8x1xf32> to vector<8x32xf32>
    %198 = arith.mulf %187, %197 : vector<8x32xf32>
    %199 = vector.broadcast %188 : vector<1x32xf32> to vector<8x32xf32>
    %200 = arith.mulf %198, %199 : vector<8x32xf32>
    %c0_49 = arith.constant 0 : index
    %c0_50 = arith.constant 0 : index
    %201 = vector.load %arg9[%c0_49, %c0_50] : memref<32x128xf32, #tpu.memory_space<vmem>>, vector<32x128xf32>
    %cst_51 = arith.constant dense<0.000000e+00> : vector<8x128xf32>
    %202 = tpu.matmul %200, %201, %cst_51 {dimension_numbers = #tpu.dot_dimension_numbers<[1], [0], [0], [1], [0, 0, 1, 1], [], []>} : vector<8x32xf32>, vector<32x128xf32>, vector<8x128xf32> -> vector<8x128xf32>
    %203 = vector.extract_strided_slice %202 {offsets = [0, 0], sizes = [8, 64], strides = [1, 1]} : vector<8x128xf32> to vector<8x64xf32>
    %204 = vector.extract_strided_slice %202 {offsets = [0, 64], sizes = [8, 64], strides = [1, 1]} : vector<8x128xf32> to vector<8x64xf32>
    %205 = arith.negf %203 : vector<8x64xf32>
    %206 = math.exp %205 : vector<8x64xf32>
    %cst_52 = arith.constant 1.000000e+00 : f32
    %207 = vector.broadcast %cst_52 : f32 to vector<8x64xf32>
    %208 = arith.addf %207, %206 : vector<8x64xf32>
    %209 = arith.divf %207, %208 : vector<8x64xf32>
    %210 = arith.mulf %203, %209 : vector<8x64xf32>
    %211 = arith.mulf %210, %204 : vector<8x64xf32>
    %c0_53 = arith.constant 0 : index
    %c0_54 = arith.constant 0 : index
    %212 = vector.load %arg10[%c0_53, %c0_54] : memref<64x32xf32, #tpu.memory_space<vmem>>, vector<64x32xf32>
    %cst_55 = arith.constant dense<0.000000e+00> : vector<8x32xf32>
    %213 = tpu.matmul %211, %212, %cst_55 {dimension_numbers = #tpu.dot_dimension_numbers<[1], [0], [0], [1], [0, 0, 1, 1], [], []>} : vector<8x64xf32>, vector<64x32xf32>, vector<8x32xf32> -> vector<8x32xf32>
    %214 = arith.addf %187, %213 : vector<8x32xf32>
    %c0_56 = arith.constant 0 : index
    %c0_57 = arith.constant 0 : index
    %c0_58 = arith.constant 0 : index
    %215 = vector.load %arg11[%c0_56, %c0_57, %c0_58] : memref<1x8x32xf32, #tpu.memory_space<vmem>>, vector<1x8x32xf32>
    %216 = vector.shape_cast %215 : vector<1x8x32xf32> to vector<8x32xf32>
    %217 = vector.shape_cast %214 : vector<8x32xf32> to vector<1x8x32xf32>
    tpu.vector_store %arg11[%c0_56, %c0_57, %c0_58], %217 {strides = array<i32>} : memref<1x8x32xf32, #tpu.memory_space<vmem>>, vector<1x8x32xf32>,
    return
  }
  func.func @transform_0(%arg0: i32) -> (i32, i32, i32) {
    %c0_i32 = arith.constant 0 : i32
    %c0_i32_0 = arith.constant 0 : i32
    %c0_i32_1 = arith.constant 0 : i32
    return %arg0, %c0_i32, %c0_i32_0 : i32, i32, i32
  }
  func.func @transform_1(%arg0: i32) -> (i32, i32, i32) {
    %c0_i32 = arith.constant 0 : i32
    %c0_i32_0 = arith.constant 0 : i32
    %c0_i32_1 = arith.constant 0 : i32
    return %arg0, %c0_i32, %c0_i32_0 : i32, i32, i32
  }
  func.func @transform_2(%arg0: i32) -> (i32, i32, i32) {
    %c0_i32 = arith.constant 0 : i32
    %c0_i32_0 = arith.constant 0 : i32
    %c0_i32_1 = arith.constant 0 : i32
    return %arg0, %c0_i32, %c0_i32_0 : i32, i32, i32
  }
  func.func @transform_3(%arg0: i32) -> (i32, i32, i32) {
    %c0_i32 = arith.constant 0 : i32
    %c0_i32_0 = arith.constant 0 : i32
    %c0_i32_1 = arith.constant 0 : i32
    return %arg0, %c0_i32, %c0_i32_0 : i32, i32, i32
  }
  func.func @transform_4(%arg0: i32) -> (i32, i32) {
    %c0_i32 = arith.constant 0 : i32
    %c0_i32_0 = arith.constant 0 : i32
    %c0_i32_1 = arith.constant 0 : i32
    return %c0_i32, %c0_i32_0 : i32, i32
  }
  func.func @transform_5(%arg0: i32) -> (i32, i32) {
    %c0_i32 = arith.constant 0 : i32
    %c0_i32_0 = arith.constant 0 : i32
    %c0_i32_1 = arith.constant 0 : i32
    return %c0_i32, %c0_i32_0 : i32, i32
  }
  func.func @transform_6(%arg0: i32) -> (i32, i32) {
    %c0_i32 = arith.constant 0 : i32
    %c0_i32_0 = arith.constant 0 : i32
    %c0_i32_1 = arith.constant 0 : i32
    return %c0_i32, %c0_i32_0 : i32, i32
  }
  func.func @transform_7(%arg0: i32) -> (i32, i32) {
    %c0_i32 = arith.constant 0 : i32
    %c0_i32_0 = arith.constant 0 : i32
    %c0_i32_1 = arith.constant 0 : i32
    return %c0_i32, %c0_i32_0 : i32, i32
  }
  func.func @transform_8(%arg0: i32) -> (i32, i32) {
    %c0_i32 = arith.constant 0 : i32
    %c0_i32_0 = arith.constant 0 : i32
    %c0_i32_1 = arith.constant 0 : i32
    return %c0_i32, %c0_i32_0 : i32, i32
  }
  func.func @transform_9(%arg0: i32) -> (i32, i32) {
    %c0_i32 = arith.constant 0 : i32
    %c0_i32_0 = arith.constant 0 : i32
    %c0_i32_1 = arith.constant 0 : i32
    return %c0_i32, %c0_i32_0 : i32, i32
  }
  func.func @transform_10(%arg0: i32) -> (i32, i32, i32) {
    %c0_i32 = arith.constant 0 : i32
    %c0_i32_0 = arith.constant 0 : i32
    %c0_i32_1 = arith.constant 0 : i32
    return %arg0, %c0_i32, %c0_i32_0 : i32, i32, i32
  }
}

</mosaic_0001>

<llo_original>
// kernel: tpu_custom_call.1
$region0: #{tpu_custom_call.1}
  #allocation0 [shape = 'u32[]', space=smem, size = 0x4, offset = 0x4, fixed_abs, tag = 'smem constant byte address 0x4 - core index']
  #allocation1 [shape = 'u32[144,128]{1,0:T(1,128)}', space=vmem, size = 0x12000, scoped, tag = 'internal scratch']
  %s0 = inlined_call_operand.vmem [shape: f32[2,8,32], index: 0, kind: input, shape index: {}]
  %s1 = inlined_call_operand.vmem [shape: f32[2,1,8], index: 1, kind: input, shape index: {}]
  %s2 = inlined_call_operand.vmem [shape: f32[2,8,4], index: 2, kind: input, shape index: {}]
  %s3 = inlined_call_operand.vmem [shape: f32[2,8,4], index: 3, kind: input, shape index: {}]
  %s4 = inlined_call_operand.vmem [shape: f32[1,32], index: 4, kind: input, shape index: {}]
  %s5 = inlined_call_operand.vmem [shape: f32[32,96], index: 5, kind: input, shape index: {}]
  %s6 = inlined_call_operand.vmem [shape: f32[32,32], index: 6, kind: input, shape index: {}]
  %s7 = inlined_call_operand.vmem [shape: f32[1,32], index: 7, kind: input, shape index: {}]
  %s8 = inlined_call_operand.vmem [shape: f32[32,128], index: 8, kind: input, shape index: {}]
  %s9 = inlined_call_operand.vmem [shape: f32[64,32], index: 9, kind: input, shape index: {}]
  %s10 = inlined_call_operand.hbm [shape: f32[2,8,32], index: 10, kind: output, shape index: {}]
  %s11 = sld [smem:[#allocation0]]
  $region73: #{tpu_custom_call.1} parent=0
    _
  %s13 = ssub.s32 1, %s11
  %s14 = scalar_select 0, %s13, %s11
  $region1: #{tpu_custom_call.1} parent=0
    #allocation2 [shape = 'u8[8192]{0}', space=vmem, size = 0x2000, scoped, tag = 'output window, operand 0']
    #allocation3 [shape = 's32[2]{0}', space=sflag, size = 0x8, scoped, tag = 'scoped memory for tpu_custom_call.1']
    %15 = vsyncpa [#allocation3], 0
    %s16 = scalar_lea.sflag [#allocation3], 1
    %17 = vsyncpa %s16, 0
    loop: start=0, step=1, limit=4
    $region2: #{tpu_custom_call.1} parent=1 // loop_pre_header
      _
    $region3: #{tpu_custom_call.1} parent=1 // loop_header
      %s19 = sphi 0, %s23
      %p20 = scmp.ge.s32.totalorder %s19, 4
      %s29 = sphi 0, %s31
      %s32 = sphi 0, %s29
      %s33 = sphi 0, %s32
      %s49 = sphi 0, %s33
      %s55 = sphi 0, %s57
      %s58 = sphi 0, %s55
      %s59 = sphi 0, %s58
      %s75 = sphi 0, %s59
      %s81 = sphi 0, %s83
      %s84 = sphi 0, %s81
      %s85 = sphi 0, %s84
      %s101 = sphi 0, %s85
      %s107 = sphi 0, %s109
      %s110 = sphi 0, %s107
      %s111 = sphi 0, %s110
      %s127 = sphi 0, %s111
      %s131 = sphi 0, %s131
      %s133 = sphi 0, %s131
      %s134 = sphi 0, %s133
      %s148 = sphi 0, %s134
      %s152 = sphi 0, %s152
      %s154 = sphi 0, %s152
      %s155 = sphi 0, %s154
      %s169 = sphi 0, %s155
      %s173 = sphi 0, %s173
      %s175 = sphi 0, %s173
      %s176 = sphi 0, %s175
      %s190 = sphi 0, %s176
      %s194 = sphi 0, %s194
      %s196 = sphi 0, %s194
      %s197 = sphi 0, %s196
      %s211 = sphi 0, %s197
      %s215 = sphi 0, %s215
      %s217 = sphi 0, %s215
      %s218 = sphi 0, %s217
      %s232 = sphi 0, %s218
      %s236 = sphi 0, %s236
      %s238 = sphi 0, %s236
      %s239 = sphi 0, %s238
      %s253 = sphi 0, %s239
      %s259 = sphi 0, %s261
      %s262 = sphi 0, %s259
      %s263 = sphi 0, %s262
      %s279 = sphi 0, %s263
    $region4: #{tpu_custom_call.1} parent=1 // loop_header_branch
      %22 = sbr.rel (%p20) target = $region8
    $region5: #{tpu_custom_call.1} parent=1 // loop_body
      %s24 = ssub.s32 %s19, 1
      %s25 = ssub.s32 %s19, 2
      %s26 = sadd.s32 %s19, 1
      %s27 = ssub.s32 %s19, %s26
      %p28 = scmp.eq.s32.totalorder %s27, 0
      %s30 = sadd.s32 %s29, 1
      %s31 = scalar_select %p28, %s29, %s30
      %p34 = pneg %p28
      %p35 = scmp.eq.s32.totalorder %s19, 1
      %p36 = por %p34, %p35
      %p37 = scmp.ne.s32.totalorder %s29, %s32
      %p38 = scmp.eq.s32.totalorder %s19, 0
      %p39 = por %p37, %p38
      %p40 = scmp.ne.s32.totalorder %s29, %s32
      %p41 = scmp.eq.s32.totalorder %s24, 1
      %p42 = por %p40, %p41
      %p43 = scmp.ne.s32.totalorder %s32, %s33
      %p44 = scmp.eq.s32.totalorder %s24, 0
      %p45 = por %p43, %p44
      %p46 = scmp.ne.s32.totalorder %s32, %s33
      %p47 = scmp.eq.s32.totalorder %s25, 1
      %p48 = por %p46, %p47
      %p50 = scmp.ne.s32.totalorder %s33, %s49
      %p51 = scmp.eq.s32.totalorder %s25, 0
      %p52 = por %p50, %p51
      %s53 = ssub.s32 %s19, %s26
      %p54 = scmp.eq.s32.totalorder %s53, 0
      %s56 = sadd.s32 %s55, 1
      %s57 = scalar_select %p54, %s55, %s56
      %p60 = pneg %p54
      %p61 = scmp.eq.s32.totalorder %s19, 1
      %p62 = por %p60, %p61
      %p63 = scmp.ne.s32.totalorder %s55, %s58
      %p64 = scmp.eq.s32.totalorder %s19, 0
      %p65 = por %p63, %p64
      %p66 = scmp.ne.s32.totalorder %s55, %s58
      %p67 = scmp.eq.s32.totalorder %s24, 1
      %p68 = por %p66, %p67
      %p69 = scmp.ne.s32.totalorder %s58, %s59
      %p70 = scmp.eq.s32.totalorder %s24, 0
      %p71 = por %p69, %p70
      %p72 = scmp.ne.s32.totalorder %s58, %s59
      %p73 = scmp.eq.s32.totalorder %s25, 1
      %p74 = por %p72, %p73
      %p76 = scmp.ne.s32.totalorder %s59, %s75
      %p77 = scmp.eq.s32.totalorder %s25, 0
      %p78 = por %p76, %p77
      %s79 = ssub.s32 %s19, %s26
      %p80 = scmp.eq.s32.totalorder %s79, 0
      %s82 = sadd.s32 %s81, 1
      %s83 = scalar_select %p80, %s81, %s82
      %p86 = pneg %p80
      %p87 = scmp.eq.s32.totalorder %s19, 1
      %p88 = por %p86, %p87
      %p89 = scmp.ne.s32.totalorder %s81, %s84
      %p90 = scmp.eq.s32.totalorder %s19, 0
      %p91 = por %p89, %p90
      %p92 = scmp.ne.s32.totalorder %s81, %s84
      %p93 = scmp.eq.s32.totalorder %s24, 1
      %p94 = por %p92, %p93
      %p95 = scmp.ne.s32.totalorder %s84, %s85
      %p96 = scmp.eq.s32.totalorder %s24, 0
      %p97 = por %p95, %p96
      %p98 = scmp.ne.s32.totalorder %s84, %s85
      %p99 = scmp.eq.s32.totalorder %s25, 1
      %p100 = por %p98, %p99
      %p102 = scmp.ne.s32.totalorder %s85, %s101
      %p103 = scmp.eq.s32.totalorder %s25, 0
      %p104 = por %p102, %p103
      %s105 = ssub.s32 %s19, %s26
      %p106 = scmp.eq.s32.totalorder %s105, 0
      %s108 = sadd.s32 %s107, 1
      %s109 = scalar_select %p106, %s107, %s108
      %p112 = pneg %p106
      %p113 = scmp.eq.s32.totalorder %s19, 1
      %p114 = por %p112, %p113
      %p115 = scmp.ne.s32.totalorder %s107, %s110
      %p116 = scmp.eq.s32.totalorder %s19, 0
      %p117 = por %p115, %p116
      %p118 = scmp.ne.s32.totalorder %s107, %s110
      %p119 = scmp.eq.s32.totalorder %s24, 1
      %p120 = por %p118, %p119
      %p121 = scmp.ne.s32.totalorder %s110, %s111
      %p122 = scmp.eq.s32.totalorder %s24, 0
      %p123 = por %p121, %p122
      %p124 = scmp.ne.s32.totalorder %s110, %s111
      %p125 = scmp.eq.s32.totalorder %s25, 1
      %p126 = por %p124, %p125
      %p128 = scmp.ne.s32.totalorder %s111, %s127
      %p129 = scmp.eq.s32.totalorder %s25, 0
      %p130 = por %p128, %p129
      %s132 = sadd.s32 %s131, 1
      %p135 = scmp.eq.s32.totalorder %s19, 1
      %p136 = scmp.ne.s32.totalorder %s131, %s133
      %p137 = scmp.eq.s32.totalorder %s19, 0
      %p138 = por %p136, %p137
      %p139 = scmp.ne.s32.totalorder %s131, %s133
      %p140 = scmp.eq.s32.totalorder %s24, 1
      %p141 = por %p139, %p140
      %p142 = scmp.ne.s32.totalorder %s133, %s134
      %p143 = scmp.eq.s32.totalorder %s24, 0
      %p144 = por %p142, %p143
      %p145 = scmp.ne.s32.totalorder %s133, %s134
      %p146 = scmp.eq.s32.totalorder %s25, 1
      %p147 = por %p145, %p146
      %p149 = scmp.ne.s32.totalorder %s134, %s148
      %p150 = scmp.eq.s32.totalorder %s25, 0
      %p151 = por %p149, %p150
      %s153 = sadd.s32 %s152, 1
      %p156 = scmp.eq.s32.totalorder %s19, 1
      %p157 = scmp.ne.s32.totalorder %s152, %s154
      %p158 = scmp.eq.s32.totalorder %s19, 0
      %p159 = por %p157, %p158
      %p160 = scmp.ne.s32.totalorder %s152, %s154
      %p161 = scmp.eq.s32.totalorder %s24, 1
      %p162 = por %p160, %p161
      %p163 = scmp.ne.s32.totalorder %s154, %s155
      %p164 = scmp.eq.s32.totalorder %s24, 0
      %p165 = por %p163, %p164
      %p166 = scmp.ne.s32.totalorder %s154, %s155
      %p167 = scmp.eq.s32.totalorder %s25, 1
      %p168 = por %p166, %p167
      %p170 = scmp.ne.s32.totalorder %s155, %s169
      %p171 = scmp.eq.s32.totalorder %s25, 0
      %p172 = por %p170, %p171
      %s174 = sadd.s32 %s173, 1
      %p177 = scmp.eq.s32.totalorder %s19, 1
      %p178 = scmp.ne.s32.totalorder %s173, %s175
      %p179 = scmp.eq.s32.totalorder %s19, 0
      %p180 = por %p178, %p179
      %p181 = scmp.ne.s32.totalorder %s173, %s175
      %p182 = scmp.eq.s32.totalorder %s24, 1
      %p183 = por %p181, %p182
      %p184 = scmp.ne.s32.totalorder %s175, %s176
      %p185 = scmp.eq.s32.totalorder %s24, 0
      %p186 = por %p184, %p185
      %p187 = scmp.ne.s32.totalorder %s175, %s176
      %p188 = scmp.eq.s32.totalorder %s25, 1
      %p189 = por %p187, %p188
      %p191 = scmp.ne.s32.totalorder %s176, %s190
      %p192 = scmp.eq.s32.totalorder %s25, 0
      %p193 = por %p191, %p192
      %s195 = sadd.s32 %s194, 1
      %p198 = scmp.eq.s32.totalorder %s19, 1
      %p199 = scmp.ne.s32.totalorder %s194, %s196
      %p200 = scmp.eq.s32.totalorder %s19, 0
      %p201 = por %p199, %p200
      %p202 = scmp.ne.s32.totalorder %s194, %s196
      %p203 = scmp.eq.s32.totalorder %s24, 1
      %p204 = por %p202, %p203
      %p205 = scmp.ne.s32.totalorder %s196, %s197
      %p206 = scmp.eq.s32.totalorder %s24, 0
      %p207 = por %p205, %p206
      %p208 = scmp.ne.s32.totalorder %s196, %s197
      %p209 = scmp.eq.s32.totalorder %s25, 1
      %p210 = por %p208, %p209
      %p212 = scmp.ne.s32.totalorder %s197, %s211
      %p213 = scmp.eq.s32.totalorder %s25, 0
      %p214 = por %p212, %p213
      %s216 = sadd.s32 %s215, 1
      %p219 = scmp.eq.s32.totalorder %s19, 1
      %p220 = scmp.ne.s32.totalorder %s215, %s217
      %p221 = scmp.eq.s32.totalorder %s19, 0
      %p222 = por %p220, %p221
      %p223 = scmp.ne.s32.totalorder %s215, %s217
      %p224 = scmp.eq.s32.totalorder %s24, 1
      %p225 = por %p223, %p224
      %p226 = scmp.ne.s32.totalorder %s217, %s218
      %p227 = scmp.eq.s32.totalorder %s24, 0
      %p228 = por %p226, %p227
      %p229 = scmp.ne.s32.totalorder %s217, %s218
      %p230 = scmp.eq.s32.totalorder %s25, 1
      %p231 = por %p229, %p230
      %p233 = scmp.ne.s32.totalorder %s218, %s232
      %p234 = scmp.eq.s32.totalorder %s25, 0
      %p235 = por %p233, %p234
      %s237 = sadd.s32 %s236, 1
      %p240 = scmp.eq.s32.totalorder %s19, 1
      %p241 = scmp.ne.s32.totalorder %s236, %s238
      %p242 = scmp.eq.s32.totalorder %s19, 0
      %p243 = por %p241, %p242
      %p244 = scmp.ne.s32.totalorder %s236, %s238
      %p245 = scmp.eq.s32.totalorder %s24, 1
      %p246 = por %p244, %p245
      %p247 = scmp.ne.s32.totalorder %s238, %s239
      %p248 = scmp.eq.s32.totalorder %s24, 0
      %p249 = por %p247, %p248
      %p250 = scmp.ne.s32.totalorder %s238, %s239
      %p251 = scmp.eq.s32.totalorder %s25, 1
      %p252 = por %p250, %p251
      %p254 = scmp.ne.s32.totalorder %s239, %s253
      %p255 = scmp.eq.s32.totalorder %s25, 0
      %p256 = por %p254, %p255
      %s257 = ssub.s32 %s19, %s26
      %p258 = scmp.eq.s32.totalorder %s257, 0
      %s260 = sadd.s32 %s259, 1
      %s261 = scalar_select %p258, %s259, %s260
      %p264 = pneg %p258
      %p265 = scmp.eq.s32.totalorder %s19, 1
      %p266 = por %p264, %p265
      %p267 = scmp.ne.s32.totalorder %s259, %s262
      %p268 = scmp.eq.s32.totalorder %s19, 0
      %p269 = por %p267, %p268
      %p270 = scmp.ne.s32.totalorder %s259, %s262
      %p271 = scmp.eq.s32.totalorder %s24, 1
      %p272 = por %p270, %p271
      %p273 = scmp.ne.s32.totalorder %s262, %s263
      %p274 = scmp.eq.s32.totalorder %s24, 0
      %p275 = por %p273, %p274
      %p276 = scmp.ne.s32.totalorder %s262, %s263
      %p277 = scmp.eq.s32.totalorder %s25, 1
      %p278 = por %p276, %p277
      %p280 = scmp.ne.s32.totalorder %s263, %s279
      %p281 = scmp.eq.s32.totalorder %s25, 0
      %p282 = por %p280, %p281
      %p283 = scmp.le.s32.totalorder 1, %s19
      %p284 = scmp.lt.s32.totalorder %s19, 3
      %p285 = pnand %p283, %p284
      %p286 = pneg %p285
      // Predicated region
      $region9: #{tpu_custom_call.1} parent=5 // pred_check
        _
      $region10: #{tpu_custom_call.1} parent=5 // pred_check_branch
        %288 = sbr.rel (%p285) target = $region12
      $region11: #{tpu_custom_call.1} parent=5 // pred_region
        %s289 = ssub.s32 %s19, 1
        // Predicated region
        $region13: #{tpu_custom_call.1} parent=11 // pred_check
          %p290 = pneg %p144
        $region14: #{tpu_custom_call.1} parent=11 // pred_check_branch
          %292 = sbr.rel (%p290) target = $region16
        $region15: #{tpu_custom_call.1} parent=11 // pred_region
          _
        $region16: #{tpu_custom_call.1} parent=11 // pred_fallthru
          _
        // Predicated region
        $region17: #{tpu_custom_call.1} parent=11 // pred_check
          %p293 = pneg %p165
        $region18: #{tpu_custom_call.1} parent=11 // pred_check_branch
          %295 = sbr.rel (%p293) target = $region20
        $region19: #{tpu_custom_call.1} parent=11 // pred_region
          _
        $region20: #{tpu_custom_call.1} parent=11 // pred_fallthru
          _
        // Predicated region
        $region21: #{tpu_custom_call.1} parent=11 // pred_check
          %p296 = pneg %p186
        $region22: #{tpu_custom_call.1} parent=11 // pred_check_branch
          %298 = sbr.rel (%p296) target = $region24
        $region23: #{tpu_custom_call.1} parent=11 // pred_region
          _
        $region24: #{tpu_custom_call.1} parent=11 // pred_fallthru
          _
        // Predicated region
        $region25: #{tpu_custom_call.1} parent=11 // pred_check
          %p299 = pneg %p207
        $region26: #{tpu_custom_call.1} parent=11 // pred_check_branch
          %301 = sbr.rel (%p299) target = $region28
        $region27: #{tpu_custom_call.1} parent=11 // pred_region
          _
        $region28: #{tpu_custom_call.1} parent=11 // pred_fallthru
          _
        // Predicated region
        $region29: #{tpu_custom_call.1} parent=11 // pred_check
          %p302 = pneg %p228
        $region30: #{tpu_custom_call.1} parent=11 // pred_check_branch
          %304 = sbr.rel (%p302) target = $region32
        $region31: #{tpu_custom_call.1} parent=11 // pred_region
          _
        $region32: #{tpu_custom_call.1} parent=11 // pred_fallthru
          _
        // Predicated region
        $region33: #{tpu_custom_call.1} parent=11 // pred_check
          %p305 = pneg %p249
        $region34: #{tpu_custom_call.1} parent=11 // pred_check_branch
          %307 = sbr.rel (%p305) target = $region36
        $region35: #{tpu_custom_call.1} parent=11 // pred_region
          _
        $region36: #{tpu_custom_call.1} parent=11 // pred_fallthru
          _
      $region12: #{tpu_custom_call.1} parent=5 // pred_fallthru
        _
      %p308 = scmp.lt.s32.totalorder %s19, 2
      // Predicated region
      $region37: #{tpu_custom_call.1} parent=5 // pred_check
        %p309 = pneg %p308
      $region38: #{tpu_custom_call.1} parent=5 // pred_check_branch
        %311 = sbr.rel (%p309) target = $region40
      $region39: #{tpu_custom_call.1} parent=5 // pred_region
        // Predicated region
        $region41: #{tpu_custom_call.1} parent=39 // pred_check
          %p312 = pneg %p39
        $region42: #{tpu_custom_call.1} parent=39 // pred_check_branch
          %314 = sbr.rel (%p312) target = $region44
        $region43: #{tpu_custom_call.1} parent=39 // pred_region
          %p315 = scmp.lt.s32.totalorder %s19, 1
          %s316 = scalar_select %p315, %s19, 1
          %s317 = smul.addr %s316, 8
          %s318 = scalar_lea.vmem %s0, %s317
        $region44: #{tpu_custom_call.1} parent=39 // pred_fallthru
          _
        // Predicated region
        $region45: #{tpu_custom_call.1} parent=39 // pred_check
          %p319 = pneg %p65
        $region46: #{tpu_custom_call.1} parent=39 // pred_check_branch
          %321 = sbr.rel (%p319) target = $region48
        $region47: #{tpu_custom_call.1} parent=39 // pred_region
          %p322 = scmp.lt.s32.totalorder %s19, 1
          %s323 = scalar_select %p322, %s19, 1
          %s324 = scalar_lea.vmem %s1, %s323
        $region48: #{tpu_custom_call.1} parent=39 // pred_fallthru
          _
        // Predicated region
        $region49: #{tpu_custom_call.1} parent=39 // pred_check
          %p325 = pneg %p91
        $region50: #{tpu_custom_call.1} parent=39 // pred_check_branch
          %327 = sbr.rel (%p325) target = $region52
        $region51: #{tpu_custom_call.1} parent=39 // pred_region
          %p328 = scmp.lt.s32.totalorder %s19, 1
          %s329 = scalar_select %p328, %s19, 1
          %s330 = smul.addr %s329, 8
          %s331 = scalar_lea.vmem %s2, %s330
        $region52: #{tpu_custom_call.1} parent=39 // pred_fallthru
          _
        // Predicated region
        $region53: #{tpu_custom_call.1} parent=39 // pred_check
          %p332 = pneg %p117
        $region54: #{tpu_custom_call.1} parent=39 // pred_check_branch
          %334 = sbr.rel (%p332) target = $region56
        $region55: #{tpu_custom_call.1} parent=39 // pred_region
          %p335 = scmp.lt.s32.totalorder %s19, 1
          %s336 = scalar_select %p335, %s19, 1
          %s337 = smul.addr %s336, 8
          %s338 = scalar_lea.vmem %s3, %s337
        $region56: #{tpu_custom_call.1} parent=39 // pred_fallthru
          _
      $region40: #{tpu_custom_call.1} parent=5 // pred_fallthru
        _
      %p339 = scmp.le.s32.totalorder 1, %s19
      %p340 = scmp.lt.s32.totalorder %s19, 3
      %p341 = pnand %p339, %p340
      %p342 = pneg %p341
      // Predicated region
      $region57: #{tpu_custom_call.1} parent=5 // pred_check
        _
      $region58: #{tpu_custom_call.1} parent=5 // pred_check_branch
        %344 = sbr.rel (%p341) target = $region60
      $region59: #{tpu_custom_call.1} parent=5 // pred_region
        %s345 = ssub.s32 %s19, 1
        %p346 = scmp.lt.s32.totalorder %s24, 1
        %s347 = scalar_select %p346, %s24, 1
        %s348 = smul.addr %s347, 8
        %s349 = scalar_lea.vmem %s0, %s348
        %p350 = pneg %p45
        %p351 = pneg %p42
        %p352 = scmp.lt.s32.totalorder %s24, 1
        %s353 = scalar_select %p352, %s24, 1
        %s354 = scalar_lea.vmem %s1, %s353
        %p355 = pneg %p71
        %p356 = pneg %p68
        %p357 = scmp.lt.s32.totalorder %s24, 1
        %s358 = scalar_select %p357, %s24, 1
        %s359 = smul.addr %s358, 8
        %s360 = scalar_lea.vmem %s2, %s359
        %p361 = pneg %p97
        %p362 = pneg %p94
        %p363 = scmp.lt.s32.totalorder %s24, 1
        %s364 = scalar_select %p363, %s24, 1
        %s365 = smul.addr %s364, 8
        %s366 = scalar_lea.vmem %s3, %s365
        %p367 = pneg %p123
        %p368 = pneg %p120
        %p369 = pneg %p144
        %p370 = pneg %p141
        %p371 = pneg %p165
        %p372 = pneg %p162
        %p373 = pneg %p186
        %p374 = pneg %p183
        %p375 = pneg %p207
        %p376 = pneg %p204
        %p377 = pneg %p228
        %p378 = pneg %p225
        %p379 = pneg %p249
        %p380 = pneg %p246
        %p381 = pneg %p275
        %p382 = pneg %p272
        %s383 = sand.u32 %s262, 1
        %s384 = scalar_lea.sflag [#allocation3], %s383
        %s385 = sand.u32 %s262, 1
        %s386 = smul.addr %s385, 8
        %s387 = scalar_lea.vmem [#allocation2], %s386
        %p388 = scmp.lt.s32.totalorder %s24, 1
        %s389 = scalar_select %p388, %s24, 1
        %s390 = smul.addr %s389, 8
        %s391 = scalar_lea.vmem %s0, %s390
        %p392 = scmp.lt.s32.totalorder %s24, 1
        %s393 = scalar_select %p392, %s24, 1
        %s394 = scalar_lea.vmem %s1, %s393
        %p395 = scmp.lt.s32.totalorder %s24, 1
        %s396 = scalar_select %p395, %s24, 1
        %s397 = smul.addr %s396, 8
        %s398 = scalar_lea.vmem %s2, %s397
        %p399 = scmp.lt.s32.totalorder %s24, 1
        %s400 = scalar_select %p399, %s24, 1
        %s401 = smul.addr %s400, 8
        %s402 = scalar_lea.vmem %s3, %s401
        %v403 = vld [vmem:[%s391] sm:$0xff]
        %v404 = vld [vmem:[%s394] sm:$0x1]
        %v405 = vld [vmem:[%s398] sm:$0xff]
        %v406 = vld [vmem:[%s402] sm:$0xff]
        %v407 = vlaneseq
        %v408 = vshrl.u32 %v407, 7
        %v409 = vlaneseq
        %v410 = vand.u32 %v409, 127
        %vm411 = vcmp.le.s32.totalorder %v410, %v408
        %vm412 = vcmp.gt.f32.partialorder %v404, 0.5
        %v413 = vsel %vm412, 1, 0
        %v414 = vlaneseq
        %v415 = vshrl.u32 %v414, 7
        %v416 = vsub.s32 0, %v415
        %v417 = vrot.slane %v413, %v416
        %vm418 = vcmp.eq.s32.totalorder %v417, 1
        %vm419 = vmand %vm411, %vm418
        %v420 = vsel %vm419, 0.0, -1e+09
        %v421 = vld [vmem:[%s4] sm:$0x1]
        %v422 = vmul.f32 %v403, %v403
        %vm423 = vcmask 261120
        %v424 = vsel %vm423, %v422, 0.0
        %425 = vadd.xlane.f32.xlu0 %v424
        %v426 = vpop.xlane.xlu0 %425
        %v427 = vrcp.pop 32.0
        %v428 = vmul.f32 %v426, %v427
        %v429 = vadd.f32 %v428, 1e-06
        %v430 = vrsqrt.pop %v429
        %v431 = vmul.f32 %v403, %v430
        %v433 = vlaneseq
        %v434 = vshrl.u32 %v433, 7
        %v435 = vsub.s32 0, %v434
        %v436 = vrot.slane %v421, %v435
        %v438 = vmul.f32 %v431, %v436
        %v439 = vld [vmem:[%s5] sm:$0xff]
        %v440 = vld [vmem:[%s5 + $0x8] sm:$0xff]
        %v441 = vld [vmem:[%s5 + $0x10] sm:$0xff]
        %v442 = vld [vmem:[%s5 + $0x18] sm:$0xff]
        %v444 = vsel %vm423, %v438, 0
        %446 = vmatprep.subr.mxu0 0.0
        %447 = vmatpush1.msra.mxu0 %v439
        %448 = vmatprep.subr.mxu0 0.0
        %449 = vmatpush1.msra.mxu0 %v440
        %450 = vmatprep.subr.mxu0 0.0
        %451 = vmatpush1.msra.mxu0 %v441
        %452 = vmatprep.subr.mxu0 0.0
        %453 = vmatpush1.msra.mxu0 %v442
        %454 = vmatprep.subr.mxu0 0.0
        %455 = vmatpush1.msra.mxu0 0.0
        %456 = vmatprep.subr.mxu0 0.0
        %457 = vmatpush1.msra.mxu0 0.0
        %458 = vmatprep.subr.mxu0 0.0
        %459 = vmatpush1.msra.mxu0 0.0
        %460 = vmatprep.subr.mxu0 0.0
        %461 = vmatpush1.msra.mxu0 0.0
        %462 = vmatprep.subr.mxu0 0.0
        %463 = vmatpush1.msra.mxu0 0.0
        %464 = vmatprep.subr.mxu0 0.0
        %465 = vmatpush1.msra.mxu0 0.0
        %466 = vmatprep.subr.mxu0 0.0
        %467 = vmatpush1.msra.mxu0 0.0
        %468 = vmatprep.subr.mxu0 0.0
        %469 = vmatpush1.msra.mxu0 0.0
        %470 = vmatprep.subr.mxu0 0.0
        %471 = vmatpush1.msra.mxu0 0.0
        %472 = vmatprep.subr.mxu0 0.0
        %473 = vmatpush1.msra.mxu0 0.0
        %474 = vmatprep.subr.mxu0 0.0
        %475 = vmatpush1.msra.mxu0 0.0
        %476 = vmatprep.subr.mxu0 0.0
        %477 = vmatpush1.msra.mxu0 0.0
        %478 = vmatprep.subr.mxu0 0.0
        %479 = vmatpush1.msra.mxu0 0.0
        %480 = vmatprep.subr.mxu0 0.0
        %481 = vmatpush1.msra.mxu0 0.0
        %482 = vmatprep.subr.mxu0 0.0
        %483 = vmatpush1.msra.mxu0 0.0
        %484 = vmatprep.subr.mxu0 0.0
        %485 = vmatpush1.msra.mxu0 0.0
        %486 = vmatprep.subr.mxu0 0.0
        %487 = vmatpush1.msra.mxu0 0.0
        %488 = vmatprep.subr.mxu0 0.0
        %489 = vmatpush1.msra.mxu0 0.0
        %490 = vmatprep.subr.mxu0 0.0
        %491 = vmatpush1.msra.mxu0 0.0
        %492 = vmatprep.subr.mxu0 0.0
        %493 = vmatpush1.msra.mxu0 0.0
        %494 = vmatprep.subr.mxu0 0.0
        %495 = vmatpush1.msra.mxu0 0.0
        %496 = vmatprep.subr.mxu0 0.0
        %497 = vmatpush1.msra.mxu0 0.0
        %498 = vmatprep.subr.mxu0 0.0
        %499 = vmatpush1.msra.mxu0 0.0
        %500 = vmatprep.subr.mxu0 0.0
        %501 = vmatpush1.msra.mxu0 0.0
        %502 = vmatprep.subr.mxu0 0.0
        %503 = vmatpush1.msra.mxu0 0.0
        %504 = vmatprep.subr.mxu0 0.0
        %505 = vmatpush1.msra.mxu0 0.0
        %506 = vmatprep.subr.mxu0 0.0
        %507 = vmatpush1.msra.mxu0 0.0
        %508 = vmatprep.subr.mxu0 0.0
        %509 = vmatpush1.msra.mxu0 0.0
        %510 = vmatprep.mubr.f32.mxu0 0.0
        %511 = vmatmul.mubr.f32.gmra.mrb[0].mxu0 %v444
        %v512 = vpop.f32.mrb[0].mxu0
        %v513 = vadd.f32 0.0, %v512
        %v514 = vpop.f32.mrb[0].mxu0
        %515 = vdwg.mxu0
        %v516 = vmul.f32 %v513, %v405
        %518 = vrot.lane.b32.xlu0 %v406, 4
        %v519 = vpop.permute.xlu0 %518
        %v521 = vmul.f32 %v513, %v519
        %523 = vrot.lane.b32.xlu0 %v521, 124
        %v524 = vpop.permute.xlu0 %523
        %v526 = vsub.f32 %v516, %v524
        %v527 = vmul.f32 %v513, %v406
        %529 = vrot.lane.b32.xlu0 %v405, 4
        %v530 = vpop.permute.xlu0 %529
        %v532 = vmul.f32 %v513, %v530
        %534 = vrot.lane.b32.xlu0 %v532, 124
        %v535 = vpop.permute.xlu0 %534
        %v537 = vadd.f32 %v527, %v535
        %539 = vrot.lane.b32.xlu0 %v537, 4
        %v540 = vpop.permute.xlu0 %539
        %vm542 = vcmask 31744
        %v543 = vsel %vm542, %v526, %v540
        %544 = vrot.lane.b32.xlu0 %v405, 32
        %v545 = vpop.permute.xlu0 %544
        %v547 = vmul.f32 %v513, %v545
        %548 = vrot.lane.b32.xlu0 %v406, 36
        %v549 = vpop.permute.xlu0 %548
        %v551 = vmul.f32 %v513, %v549
        %553 = vrot.lane.b32.xlu0 %v551, 124
        %v554 = vpop.permute.xlu0 %553
        %v556 = vsub.f32 %v547, %v554
        %557 = vrot.lane.b32.xlu0 %v406, 32
        %v558 = vpop.permute.xlu0 %557
        %v560 = vmul.f32 %v513, %v558
        %561 = vrot.lane.b32.xlu0 %v405, 36
        %v562 = vpop.permute.xlu0 %561
        %v564 = vmul.f32 %v513, %v562
        %566 = vrot.lane.b32.xlu0 %v564, 124
        %v567 = vpop.permute.xlu0 %566
        %v569 = vadd.f32 %v560, %v567
        %571 = vrot.lane.b32.xlu0 %v556, 96
        %v572 = vpop.permute.xlu0 %571
        %575 = vrot.lane.b32.xlu0 %v569, 100
        %v576 = vpop.permute.xlu0 %575
        %v578 = vsel %vm542, %v572, %v576
        %vm579 = vcmask 64512
        %v581 = vsel %vm579, %v543, 0
        %v584 = vsel %vm579, %v578, 0
        %586 = vmatprep.subr.mxu0 0.0
        %587 = vmatpush1.xpose.msra.mxu0 %v584
        %588 = vmatprep.subr.mxu0 0.0
        %589 = vmatpush1.xpose.msra.mxu0 0.0
        %590 = vmatprep.subr.mxu0 0.0
        %591 = vmatpush1.xpose.msra.mxu0 0.0
        %592 = vmatprep.subr.mxu0 0.0
        %593 = vmatpush1.xpose.msra.mxu0 0.0
        %594 = vmatprep.subr.mxu0 0.0
        %595 = vmatpush1.xpose.msra.mxu0 0.0
        %596 = vmatprep.subr.mxu0 0.0
        %597 = vmatpush1.xpose.msra.mxu0 0.0
        %598 = vmatprep.subr.mxu0 0.0
        %599 = vmatpush1.xpose.msra.mxu0 0.0
        %600 = vmatprep.subr.mxu0 0.0
        %601 = vmatpush1.xpose.msra.mxu0 0.0
        %602 = vmatprep.subr.mxu0 0.0
        %603 = vmatpush1.xpose.msra.mxu0 0.0
        %604 = vmatprep.subr.mxu0 0.0
        %605 = vmatpush1.xpose.msra.mxu0 0.0
        %606 = vmatprep.subr.mxu0 0.0
        %607 = vmatpush1.xpose.msra.mxu0 0.0
        %608 = vmatprep.subr.mxu0 0.0
        %609 = vmatpush1.xpose.msra.mxu0 0.0
        %610 = vmatprep.subr.mxu0 0.0
        %611 = vmatpush1.xpose.msra.mxu0 0.0
        %612 = vmatprep.subr.mxu0 0.0
        %613 = vmatpush1.xpose.msra.mxu0 0.0
        %614 = vmatprep.subr.mxu0 0.0
        %615 = vmatpush1.xpose.msra.mxu0 0.0
        %616 = vmatprep.subr.mxu0 0.0
        %617 = vmatpush1.xpose.msra.mxu0 0.0
        %618 = vmatprep.subr.mxu0 0.0
        %619 = vmatpush1.xpose.msra.mxu0 0.0
        %620 = vmatprep.subr.mxu0 0.0
        %621 = vmatpush1.xpose.msra.mxu0 0.0
        %622 = vmatprep.subr.mxu0 0.0
        %623 = vmatpush1.xpose.msra.mxu0 0.0
        %624 = vmatprep.subr.mxu0 0.0
        %625 = vmatpush1.xpose.msra.mxu0 0.0
        %626 = vmatprep.subr.mxu0 0.0
        %627 = vmatpush1.xpose.msra.mxu0 0.0
        %628 = vmatprep.subr.mxu0 0.0
        %629 = vmatpush1.xpose.msra.mxu0 0.0
        %630 = vmatprep.subr.mxu0 0.0
        %631 = vmatpush1.xpose.msra.mxu0 0.0
        %632 = vmatprep.subr.mxu0 0.0
        %633 = vmatpush1.xpose.msra.mxu0 0.0
        %634 = vmatprep.subr.mxu0 0.0
        %635 = vmatpush1.xpose.msra.mxu0 0.0
        %636 = vmatprep.subr.mxu0 0.0
        %637 = vmatpush1.xpose.msra.mxu0 0.0
        %638 = vmatprep.subr.mxu0 0.0
        %639 = vmatpush1.xpose.msra.mxu0 0.0
        %640 = vmatprep.subr.mxu0 0.0
        %641 = vmatpush1.xpose.msra.mxu0 0.0
        %642 = vmatprep.subr.mxu0 0.0
        %643 = vmatpush1.xpose.msra.mxu0 0.0
        %644 = vmatprep.subr.mxu0 0.0
        %645 = vmatpush1.xpose.msra.mxu0 0.0
        %646 = vmatprep.subr.mxu0 0.0
        %647 = vmatpush1.xpose.msra.mxu0 0.0
        %648 = vmatprep.subr.mxu0 0.0
        %649 = vmatpush1.xpose.msra.mxu0 0.0
        %650 = vmatprep.mubr.f32.mxu0 0.0
        %651 = vmatmul.mubr.f32.gmra.mrb[0].mxu0 %v581
        %v652 = vpop.f32.mrb[0].mxu0
        %v653 = vadd.f32 0.0, %v652
        %v654 = vpop.f32.mrb[0].mxu0
        %655 = vdwg.mxu0
        %v656 = vmul.f32 %v653, 0.35355338
        %v657 = vadd.f32 %v656, %v420
        %v658 = vsel %vm579, %v657, -inf
        %659 = vmax.xlane.f32.xlu0 %v658
        %v660 = vpop.xlane.xlu0 %659
        %v661 = vsub.f32 %v657, %v660
        %v662 = vmul.f32 %v661, 1.442695
        %v663 = vpow.pop %v662
        %v664 = vsel %vm579, %v663, 0.0
        %665 = vadd.xlane.f32.xlu0 %v664
        %v666 = vpop.xlane.xlu0 %665
        %v667 = vrcp.pop %v666
        %v668 = vmul.f32 %v663, %v667
        %670 = vrot.lane.b32.xlu0 %v513, 64
        %v671 = vpop.permute.xlu0 %670
        %v674 = vsel %vm579, %v668, 0
        %676 = vmatprep.subr.mxu0 0.0
        %677 = vmatpush1.msra.mxu0 %v671
        %678 = vmatprep.subr.mxu0 0.0
        %679 = vmatpush1.msra.mxu0 0.0
        %680 = vmatprep.subr.mxu0 0.0
        %681 = vmatpush1.msra.mxu0 0.0
        %682 = vmatprep.subr.mxu0 0.0
        %683 = vmatpush1.msra.mxu0 0.0
        %684 = vmatprep.subr.mxu0 0.0
        %685 = vmatpush1.msra.mxu0 0.0
        %686 = vmatprep.subr.mxu0 0.0
        %687 = vmatpush1.msra.mxu0 0.0
        %688 = vmatprep.subr.mxu0 0.0
        %689 = vmatpush1.msra.mxu0 0.0
        %690 = vmatprep.subr.mxu0 0.0
        %691 = vmatpush1.msra.mxu0 0.0
        %692 = vmatprep.subr.mxu0 0.0
        %693 = vmatpush1.msra.mxu0 0.0
        %694 = vmatprep.subr.mxu0 0.0
        %695 = vmatpush1.msra.mxu0 0.0
        %696 = vmatprep.subr.mxu0 0.0
        %697 = vmatpush1.msra.mxu0 0.0
        %698 = vmatprep.subr.mxu0 0.0
        %699 = vmatpush1.msra.mxu0 0.0
        %700 = vmatprep.subr.mxu0 0.0
        %701 = vmatpush1.msra.mxu0 0.0
        %702 = vmatprep.subr.mxu0 0.0
        %703 = vmatpush1.msra.mxu0 0.0
        %704 = vmatprep.subr.mxu0 0.0
        %705 = vmatpush1.msra.mxu0 0.0
        %706 = vmatprep.subr.mxu0 0.0
        %707 = vmatpush1.msra.mxu0 0.0
        %708 = vmatprep.subr.mxu0 0.0
        %709 = vmatpush1.msra.mxu0 0.0
        %710 = vmatprep.subr.mxu0 0.0
        %711 = vmatpush1.msra.mxu0 0.0
        %712 = vmatprep.subr.mxu0 0.0
        %713 = vmatpush1.msra.mxu0 0.0
        %714 = vmatprep.subr.mxu0 0.0
        %715 = vmatpush1.msra.mxu0 0.0
        %716 = vmatprep.subr.mxu0 0.0
        %717 = vmatpush1.msra.mxu0 0.0
        %718 = vmatprep.subr.mxu0 0.0
        %719 = vmatpush1.msra.mxu0 0.0
        %720 = vmatprep.subr.mxu0 0.0
        %721 = vmatpush1.msra.mxu0 0.0
        %722 = vmatprep.subr.mxu0 0.0
        %723 = vmatpush1.msra.mxu0 0.0
        %724 = vmatprep.subr.mxu0 0.0
        %725 = vmatpush1.msra.mxu0 0.0
        %726 = vmatprep.subr.mxu0 0.0
        %727 = vmatpush1.msra.mxu0 0.0
        %728 = vmatprep.subr.mxu0 0.0
        %729 = vmatpush1.msra.mxu0 0.0
        %730 = vmatprep.subr.mxu0 0.0
        %731 = vmatpush1.msra.mxu0 0.0
        %732 = vmatprep.subr.mxu0 0.0
        %733 = vmatpush1.msra.mxu0 0.0
        %734 = vmatprep.subr.mxu0 0.0
        %735 = vmatpush1.msra.mxu0 0.0
        %736 = vmatprep.subr.mxu0 0.0
        %737 = vmatpush1.msra.mxu0 0.0
        %738 = vmatprep.subr.mxu0 0.0
        %739 = vmatpush1.msra.mxu0 0.0
        %740 = vmatprep.mubr.f32.mxu0 0.0
        %741 = vmatmul.mubr.f32.gmra.mrb[0].mxu0 %v674
        %v742 = vpop.f32.mrb[0].mxu0
        %v743 = vadd.f32 0.0, %v742
        %v744 = vpop.f32.mrb[0].mxu0
        %745 = vdwg.mxu0
        %746 = vrot.lane.b32.xlu0 %v405, 8
        %v747 = vpop.permute.xlu0 %746
        %v749 = vmul.f32 %v513, %v747
        %750 = vrot.lane.b32.xlu0 %v406, 12
        %v751 = vpop.permute.xlu0 %750
        %v753 = vmul.f32 %v513, %v751
        %755 = vrot.lane.b32.xlu0 %v753, 124
        %v756 = vpop.permute.xlu0 %755
        %v758 = vsub.f32 %v749, %v756
        %759 = vrot.lane.b32.xlu0 %v406, 8
        %v760 = vpop.permute.xlu0 %759
        %v762 = vmul.f32 %v513, %v760
        %763 = vrot.lane.b32.xlu0 %v405, 12
        %v764 = vpop.permute.xlu0 %763
        %v766 = vmul.f32 %v513, %v764
        %768 = vrot.lane.b32.xlu0 %v766, 124
        %v769 = vpop.permute.xlu0 %768
        %v771 = vadd.f32 %v762, %v769
        %773 = vrot.lane.b32.xlu0 %v758, 120
        %v774 = vpop.permute.xlu0 %773
        %777 = vrot.lane.b32.xlu0 %v771, 124
        %v778 = vpop.permute.xlu0 %777
        %v780 = vsel %vm542, %v774, %v778
        %781 = vrot.lane.b32.xlu0 %v405, 40
        %v782 = vpop.permute.xlu0 %781
        %v784 = vmul.f32 %v513, %v782
        %785 = vrot.lane.b32.xlu0 %v406, 44
        %v786 = vpop.permute.xlu0 %785
        %v788 = vmul.f32 %v513, %v786
        %790 = vrot.lane.b32.xlu0 %v788, 124
        %v791 = vpop.permute.xlu0 %790
        %v793 = vsub.f32 %v784, %v791
        %794 = vrot.lane.b32.xlu0 %v406, 40
        %v795 = vpop.permute.xlu0 %794
        %v797 = vmul.f32 %v513, %v795
        %798 = vrot.lane.b32.xlu0 %v405, 44
        %v799 = vpop.permute.xlu0 %798
        %v801 = vmul.f32 %v513, %v799
        %803 = vrot.lane.b32.xlu0 %v801, 124
        %v804 = vpop.permute.xlu0 %803
        %v806 = vadd.f32 %v797, %v804
        %808 = vrot.lane.b32.xlu0 %v793, 88
        %v809 = vpop.permute.xlu0 %808
        %812 = vrot.lane.b32.xlu0 %v806, 92
        %v813 = vpop.permute.xlu0 %812
        %v815 = vsel %vm542, %v809, %v813
        %v817 = vsel %vm579, %v780, 0
        %v820 = vsel %vm579, %v815, 0
        %822 = vmatprep.subr.mxu0 0.0
        %823 = vmatpush1.xpose.msra.mxu0 %v820
        %824 = vmatprep.subr.mxu0 0.0
        %825 = vmatpush1.xpose.msra.mxu0 0.0
        %826 = vmatprep.subr.mxu0 0.0
        %827 = vmatpush1.xpose.msra.mxu0 0.0
        %828 = vmatprep.subr.mxu0 0.0
        %829 = vmatpush1.xpose.msra.mxu0 0.0
        %830 = vmatprep.subr.mxu0 0.0
        %831 = vmatpush1.xpose.msra.mxu0 0.0
        %832 = vmatprep.subr.mxu0 0.0
        %833 = vmatpush1.xpose.msra.mxu0 0.0
        %834 = vmatprep.subr.mxu0 0.0
        %835 = vmatpush1.xpose.msra.mxu0 0.0
        %836 = vmatprep.subr.mxu0 0.0
        %837 = vmatpush1.xpose.msra.mxu0 0.0
        %838 = vmatprep.subr.mxu0 0.0
        %839 = vmatpush1.xpose.msra.mxu0 0.0
        %840 = vmatprep.subr.mxu0 0.0
        %841 = vmatpush1.xpose.msra.mxu0 0.0
        %842 = vmatprep.subr.mxu0 0.0
        %843 = vmatpush1.xpose.msra.mxu0 0.0
        %844 = vmatprep.subr.mxu0 0.0
        %845 = vmatpush1.xpose.msra.mxu0 0.0
        %846 = vmatprep.subr.mxu0 0.0
        %847 = vmatpush1.xpose.msra.mxu0 0.0
        %848 = vmatprep.subr.mxu0 0.0
        %849 = vmatpush1.xpose.msra.mxu0 0.0
        %850 = vmatprep.subr.mxu0 0.0
        %851 = vmatpush1.xpose.msra.mxu0 0.0
        %852 = vmatprep.subr.mxu0 0.0
        %853 = vmatpush1.xpose.msra.mxu0 0.0
        %854 = vmatprep.subr.mxu0 0.0
        %855 = vmatpush1.xpose.msra.mxu0 0.0
        %856 = vmatprep.subr.mxu0 0.0
        %857 = vmatpush1.xpose.msra.mxu0 0.0
        %858 = vmatprep.subr.mxu0 0.0
        %859 = vmatpush1.xpose.msra.mxu0 0.0
        %860 = vmatprep.subr.mxu0 0.0
        %861 = vmatpush1.xpose.msra.mxu0 0.0
        %862 = vmatprep.subr.mxu0 0.0
        %863 = vmatpush1.xpose.msra.mxu0 0.0
        %864 = vmatprep.subr.mxu0 0.0
        %865 = vmatpush1.xpose.msra.mxu0 0.0
        %866 = vmatprep.subr.mxu0 0.0
        %867 = vmatpush1.xpose.msra.mxu0 0.0
        %868 = vmatprep.subr.mxu0 0.0
        %869 = vmatpush1.xpose.msra.mxu0 0.0
        %870 = vmatprep.subr.mxu0 0.0
        %871 = vmatpush1.xpose.msra.mxu0 0.0
        %872 = vmatprep.subr.mxu0 0.0
        %873 = vmatpush1.xpose.msra.mxu0 0.0
        %874 = vmatprep.subr.mxu0 0.0
        %875 = vmatpush1.xpose.msra.mxu0 0.0
        %876 = vmatprep.subr.mxu0 0.0
        %877 = vmatpush1.xpose.msra.mxu0 0.0
        %878 = vmatprep.subr.mxu0 0.0
        %879 = vmatpush1.xpose.msra.mxu0 0.0
        %880 = vmatprep.subr.mxu0 0.0
        %881 = vmatpush1.xpose.msra.mxu0 0.0
        %882 = vmatprep.subr.mxu0 0.0
        %883 = vmatpush1.xpose.msra.mxu0 0.0
        %884 = vmatprep.subr.mxu0 0.0
        %885 = vmatpush1.xpose.msra.mxu0 0.0
        %886 = vmatprep.mubr.f32.mxu0 0.0
        %887 = vmatmul.mubr.f32.gmra.mrb[0].mxu0 %v817
        %v888 = vpop.f32.mrb[0].mxu0
        %v889 = vadd.f32 0.0, %v888
        %v890 = vpop.f32.mrb[0].mxu0
        %891 = vdwg.mxu0
        %v892 = vmul.f32 %v889, 0.35355338
        %v893 = vadd.f32 %v892, %v420
        %v894 = vsel %vm579, %v893, -inf
        %895 = vmax.xlane.f32.xlu0 %v894
        %v896 = vpop.xlane.xlu0 %895
        %v897 = vsub.f32 %v893, %v896
        %v898 = vmul.f32 %v897, 1.442695
        %v899 = vpow.pop %v898
        %v900 = vsel %vm579, %v899, 0.0
        %901 = vadd.xlane.f32.xlu0 %v900
        %v902 = vpop.xlane.xlu0 %901
        %v903 = vrcp.pop %v902
        %v904 = vmul.f32 %v899, %v903
        %905 = vrot.lane.b32.xlu0 %v513, 56
        %v906 = vpop.permute.xlu0 %905
        %v909 = vsel %vm579, %v904, 0
        %911 = vmatprep.subr.mxu0 0.0
        %912 = vmatpush1.msra.mxu0 %v906
        %913 = vmatprep.subr.mxu0 0.0
        %914 = vmatpush1.msra.mxu0 0.0
        %915 = vmatprep.subr.mxu0 0.0
        %916 = vmatpush1.msra.mxu0 0.0
        %917 = vmatprep.subr.mxu0 0.0
        %918 = vmatpush1.msra.mxu0 0.0
        %919 = vmatprep.subr.mxu0 0.0
        %920 = vmatpush1.msra.mxu0 0.0
        %921 = vmatprep.subr.mxu0 0.0
        %922 = vmatpush1.msra.mxu0 0.0
        %923 = vmatprep.subr.mxu0 0.0
        %924 = vmatpush1.msra.mxu0 0.0
        %925 = vmatprep.subr.mxu0 0.0
        %926 = vmatpush1.msra.mxu0 0.0
        %927 = vmatprep.subr.mxu0 0.0
        %928 = vmatpush1.msra.mxu0 0.0
        %929 = vmatprep.subr.mxu0 0.0
        %930 = vmatpush1.msra.mxu0 0.0
        %931 = vmatprep.subr.mxu0 0.0
        %932 = vmatpush1.msra.mxu0 0.0
        %933 = vmatprep.subr.mxu0 0.0
        %934 = vmatpush1.msra.mxu0 0.0
        %935 = vmatprep.subr.mxu0 0.0
        %936 = vmatpush1.msra.mxu0 0.0
        %937 = vmatprep.subr.mxu0 0.0
        %938 = vmatpush1.msra.mxu0 0.0
        %939 = vmatprep.subr.mxu0 0.0
        %940 = vmatpush1.msra.mxu0 0.0
        %941 = vmatprep.subr.mxu0 0.0
        %942 = vmatpush1.msra.mxu0 0.0
        %943 = vmatprep.subr.mxu0 0.0
        %944 = vmatpush1.msra.mxu0 0.0
        %945 = vmatprep.subr.mxu0 0.0
        %946 = vmatpush1.msra.mxu0 0.0
        %947 = vmatprep.subr.mxu0 0.0
        %948 = vmatpush1.msra.mxu0 0.0
        %949 = vmatprep.subr.mxu0 0.0
        %950 = vmatpush1.msra.mxu0 0.0
        %951 = vmatprep.subr.mxu0 0.0
        %952 = vmatpush1.msra.mxu0 0.0
        %953 = vmatprep.subr.mxu0 0.0
        %954 = vmatpush1.msra.mxu0 0.0
        %955 = vmatprep.subr.mxu0 0.0
        %956 = vmatpush1.msra.mxu0 0.0
        %957 = vmatprep.subr.mxu0 0.0
        %958 = vmatpush1.msra.mxu0 0.0
        %959 = vmatprep.subr.mxu0 0.0
        %960 = vmatpush1.msra.mxu0 0.0
        %961 = vmatprep.subr.mxu0 0.0
        %962 = vmatpush1.msra.mxu0 0.0
        %963 = vmatprep.subr.mxu0 0.0
        %964 = vmatpush1.msra.mxu0 0.0
        %965 = vmatprep.subr.mxu0 0.0
        %966 = vmatpush1.msra.mxu0 0.0
        %967 = vmatprep.subr.mxu0 0.0
        %968 = vmatpush1.msra.mxu0 0.0
        %969 = vmatprep.subr.mxu0 0.0
        %970 = vmatpush1.msra.mxu0 0.0
        %971 = vmatprep.subr.mxu0 0.0
        %972 = vmatpush1.msra.mxu0 0.0
        %973 = vmatprep.subr.mxu0 0.0
        %974 = vmatpush1.msra.mxu0 0.0
        %975 = vmatprep.mubr.f32.mxu0 0.0
        %976 = vmatmul.mubr.f32.gmra.mrb[0].mxu0 %v909
        %v977 = vpop.f32.mrb[0].mxu0
        %v978 = vadd.f32 0.0, %v977
        %v979 = vpop.f32.mrb[0].mxu0
        %980 = vdwg.mxu0
        %981 = vrot.lane.b32.xlu0 %v405, 16
        %v982 = vpop.permute.xlu0 %981
        %v984 = vmul.f32 %v513, %v982
        %985 = vrot.lane.b32.xlu0 %v406, 20
        %v986 = vpop.permute.xlu0 %985
        %v988 = vmul.f32 %v513, %v986
        %990 = vrot.lane.b32.xlu0 %v988, 124
        %v991 = vpop.permute.xlu0 %990
        %v993 = vsub.f32 %v984, %v991
        %994 = vrot.lane.b32.xlu0 %v406, 16
        %v995 = vpop.permute.xlu0 %994
        %v997 = vmul.f32 %v513, %v995
        %998 = vrot.lane.b32.xlu0 %v405, 20
        %v999 = vpop.permute.xlu0 %998
        %v1001 = vmul.f32 %v513, %v999
        %1003 = vrot.lane.b32.xlu0 %v1001, 124
        %v1004 = vpop.permute.xlu0 %1003
        %v1006 = vadd.f32 %v997, %v1004
        %1008 = vrot.lane.b32.xlu0 %v993, 112
        %v1009 = vpop.permute.xlu0 %1008
        %1012 = vrot.lane.b32.xlu0 %v1006, 116
        %v1013 = vpop.permute.xlu0 %1012
        %v1015 = vsel %vm542, %v1009, %v1013
        %1016 = vrot.lane.b32.xlu0 %v405, 48
        %v1017 = vpop.permute.xlu0 %1016
        %v1019 = vmul.f32 %v513, %v1017
        %1020 = vrot.lane.b32.xlu0 %v406, 52
        %v1021 = vpop.permute.xlu0 %1020
        %v1023 = vmul.f32 %v513, %v1021
        %1025 = vrot.lane.b32.xlu0 %v1023, 124
        %v1026 = vpop.permute.xlu0 %1025
        %v1028 = vsub.f32 %v1019, %v1026
        %1029 = vrot.lane.b32.xlu0 %v406, 48
        %v1030 = vpop.permute.xlu0 %1029
        %v1032 = vmul.f32 %v513, %v1030
        %1033 = vrot.lane.b32.xlu0 %v405, 52
        %v1034 = vpop.permute.xlu0 %1033
        %v1036 = vmul.f32 %v513, %v1034
        %1038 = vrot.lane.b32.xlu0 %v1036, 124
        %v1039 = vpop.permute.xlu0 %1038
        %v1041 = vadd.f32 %v1032, %v1039
        %1043 = vrot.lane.b32.xlu0 %v1028, 80
        %v1044 = vpop.permute.xlu0 %1043
        %1047 = vrot.lane.b32.xlu0 %v1041, 84
        %v1048 = vpop.permute.xlu0 %1047
        %v1050 = vsel %vm542, %v1044, %v1048
        %v1052 = vsel %vm579, %v1015, 0
        %v1055 = vsel %vm579, %v1050, 0
        %1057 = vmatprep.subr.mxu0 0.0
        %1058 = vmatpush1.xpose.msra.mxu0 %v1055
        %1059 = vmatprep.subr.mxu0 0.0
        %1060 = vmatpush1.xpose.msra.mxu0 0.0
        %1061 = vmatprep.subr.mxu0 0.0
        %1062 = vmatpush1.xpose.msra.mxu0 0.0
        %1063 = vmatprep.subr.mxu0 0.0
        %1064 = vmatpush1.xpose.msra.mxu0 0.0
        %1065 = vmatprep.subr.mxu0 0.0
        %1066 = vmatpush1.xpose.msra.mxu0 0.0
        %1067 = vmatprep.subr.mxu0 0.0
        %1068 = vmatpush1.xpose.msra.mxu0 0.0
        %1069 = vmatprep.subr.mxu0 0.0
        %1070 = vmatpush1.xpose.msra.mxu0 0.0
        %1071 = vmatprep.subr.mxu0 0.0
        %1072 = vmatpush1.xpose.msra.mxu0 0.0
        %1073 = vmatprep.subr.mxu0 0.0
        %1074 = vmatpush1.xpose.msra.mxu0 0.0
        %1075 = vmatprep.subr.mxu0 0.0
        %1076 = vmatpush1.xpose.msra.mxu0 0.0
        %1077 = vmatprep.subr.mxu0 0.0
        %1078 = vmatpush1.xpose.msra.mxu0 0.0
        %1079 = vmatprep.subr.mxu0 0.0
        %1080 = vmatpush1.xpose.msra.mxu0 0.0
        %1081 = vmatprep.subr.mxu0 0.0
        %1082 = vmatpush1.xpose.msra.mxu0 0.0
        %1083 = vmatprep.subr.mxu0 0.0
        %1084 = vmatpush1.xpose.msra.mxu0 0.0
        %1085 = vmatprep.subr.mxu0 0.0
        %1086 = vmatpush1.xpose.msra.mxu0 0.0
        %1087 = vmatprep.subr.mxu0 0.0
        %1088 = vmatpush1.xpose.msra.mxu0 0.0
        %1089 = vmatprep.subr.mxu0 0.0
        %1090 = vmatpush1.xpose.msra.mxu0 0.0
        %1091 = vmatprep.subr.mxu0 0.0
        %1092 = vmatpush1.xpose.msra.mxu0 0.0
        %1093 = vmatprep.subr.mxu0 0.0
        %1094 = vmatpush1.xpose.msra.mxu0 0.0
        %1095 = vmatprep.subr.mxu0 0.0
        %1096 = vmatpush1.xpose.msra.mxu0 0.0
        %1097 = vmatprep.subr.mxu0 0.0
        %1098 = vmatpush1.xpose.msra.mxu0 0.0
        %1099 = vmatprep.subr.mxu0 0.0
        %1100 = vmatpush1.xpose.msra.mxu0 0.0
        %1101 = vmatprep.subr.mxu0 0.0
        %1102 = vmatpush1.xpose.msra.mxu0 0.0
        %1103 = vmatprep.subr.mxu0 0.0
        %1104 = vmatpush1.xpose.msra.mxu0 0.0
        %1105 = vmatprep.subr.mxu0 0.0
        %1106 = vmatpush1.xpose.msra.mxu0 0.0
        %1107 = vmatprep.subr.mxu0 0.0
        %1108 = vmatpush1.xpose.msra.mxu0 0.0
        %1109 = vmatprep.subr.mxu0 0.0
        %1110 = vmatpush1.xpose.msra.mxu0 0.0
        %1111 = vmatprep.subr.mxu0 0.0
        %1112 = vmatpush1.xpose.msra.mxu0 0.0
        %1113 = vmatprep.subr.mxu0 0.0
        %1114 = vmatpush1.xpose.msra.mxu0 0.0
        %1115 = vmatprep.subr.mxu0 0.0
        %1116 = vmatpush1.xpose.msra.mxu0 0.0
        %1117 = vmatprep.subr.mxu0 0.0
        %1118 = vmatpush1.xpose.msra.mxu0 0.0
        %1119 = vmatprep.subr.mxu0 0.0
        %1120 = vmatpush1.xpose.msra.mxu0 0.0
        %1121 = vmatprep.mubr.f32.mxu0 0.0
        %1122 = vmatmul.mubr.f32.gmra.mrb[0].mxu0 %v1052
        %v1123 = vpop.f32.mrb[0].mxu0
        %v1124 = vadd.f32 0.0, %v1123
        %v1125 = vpop.f32.mrb[0].mxu0
        %1126 = vdwg.mxu0
        %v1127 = vmul.f32 %v1124, 0.35355338
        %v1128 = vadd.f32 %v1127, %v420
        %v1129 = vsel %vm579, %v1128, -inf
        %1130 = vmax.xlane.f32.xlu0 %v1129
        %v1131 = vpop.xlane.xlu0 %1130
        %v1132 = vsub.f32 %v1128, %v1131
        %v1133 = vmul.f32 %v1132, 1.442695
        %v1134 = vpow.pop %v1133
        %v1135 = vsel %vm579, %v1134, 0.0
        %1136 = vadd.xlane.f32.xlu0 %v1135
        %v1137 = vpop.xlane.xlu0 %1136
        %v1138 = vrcp.pop %v1137
        %v1139 = vmul.f32 %v1134, %v1138
        %1140 = vrot.lane.b32.xlu0 %v513, 48
        %v1141 = vpop.permute.xlu0 %1140
        %v1144 = vsel %vm579, %v1139, 0
        %1146 = vmatprep.subr.mxu0 0.0
        %1147 = vmatpush1.msra.mxu0 %v1141
        %1148 = vmatprep.subr.mxu0 0.0
        %1149 = vmatpush1.msra.mxu0 0.0
        %1150 = vmatprep.subr.mxu0 0.0
        %1151 = vmatpush1.msra.mxu0 0.0
        %1152 = vmatprep.subr.mxu0 0.0
        %1153 = vmatpush1.msra.mxu0 0.0
        %1154 = vmatprep.subr.mxu0 0.0
        %1155 = vmatpush1.msra.mxu0 0.0
        %1156 = vmatprep.subr.mxu0 0.0
        %1157 = vmatpush1.msra.mxu0 0.0
        %1158 = vmatprep.subr.mxu0 0.0
        %1159 = vmatpush1.msra.mxu0 0.0
        %1160 = vmatprep.subr.mxu0 0.0
        %1161 = vmatpush1.msra.mxu0 0.0
        %1162 = vmatprep.subr.mxu0 0.0
        %1163 = vmatpush1.msra.mxu0 0.0
        %1164 = vmatprep.subr.mxu0 0.0
        %1165 = vmatpush1.msra.mxu0 0.0
        %1166 = vmatprep.subr.mxu0 0.0
        %1167 = vmatpush1.msra.mxu0 0.0
        %1168 = vmatprep.subr.mxu0 0.0
        %1169 = vmatpush1.msra.mxu0 0.0
        %1170 = vmatprep.subr.mxu0 0.0
        %1171 = vmatpush1.msra.mxu0 0.0
        %1172 = vmatprep.subr.mxu0 0.0
        %1173 = vmatpush1.msra.mxu0 0.0
        %1174 = vmatprep.subr.mxu0 0.0
        %1175 = vmatpush1.msra.mxu0 0.0
        %1176 = vmatprep.subr.mxu0 0.0
        %1177 = vmatpush1.msra.mxu0 0.0
        %1178 = vmatprep.subr.mxu0 0.0
        %1179 = vmatpush1.msra.mxu0 0.0
        %1180 = vmatprep.subr.mxu0 0.0
        %1181 = vmatpush1.msra.mxu0 0.0
        %1182 = vmatprep.subr.mxu0 0.0
        %1183 = vmatpush1.msra.mxu0 0.0
        %1184 = vmatprep.subr.mxu0 0.0
        %1185 = vmatpush1.msra.mxu0 0.0
        %1186 = vmatprep.subr.mxu0 0.0
        %1187 = vmatpush1.msra.mxu0 0.0
        %1188 = vmatprep.subr.mxu0 0.0
        %1189 = vmatpush1.msra.mxu0 0.0
        %1190 = vmatprep.subr.mxu0 0.0
        %1191 = vmatpush1.msra.mxu0 0.0
        %1192 = vmatprep.subr.mxu0 0.0
        %1193 = vmatpush1.msra.mxu0 0.0
        %1194 = vmatprep.subr.mxu0 0.0
        %1195 = vmatpush1.msra.mxu0 0.0
        %1196 = vmatprep.subr.mxu0 0.0
        %1197 = vmatpush1.msra.mxu0 0.0
        %1198 = vmatprep.subr.mxu0 0.0
        %1199 = vmatpush1.msra.mxu0 0.0
        %1200 = vmatprep.subr.mxu0 0.0
        %1201 = vmatpush1.msra.mxu0 0.0
        %1202 = vmatprep.subr.mxu0 0.0
        %1203 = vmatpush1.msra.mxu0 0.0
        %1204 = vmatprep.subr.mxu0 0.0
        %1205 = vmatpush1.msra.mxu0 0.0
        %1206 = vmatprep.subr.mxu0 0.0
        %1207 = vmatpush1.msra.mxu0 0.0
        %1208 = vmatprep.subr.mxu0 0.0
        %1209 = vmatpush1.msra.mxu0 0.0
        %1210 = vmatprep.mubr.f32.mxu0 0.0
        %1211 = vmatmul.mubr.f32.gmra.mrb[0].mxu0 %v1144
        %v1212 = vpop.f32.mrb[0].mxu0
        %v1213 = vadd.f32 0.0, %v1212
        %v1214 = vpop.f32.mrb[0].mxu0
        %1215 = vdwg.mxu0
        %1216 = vrot.lane.b32.xlu0 %v405, 24
        %v1217 = vpop.permute.xlu0 %1216
        %v1219 = vmul.f32 %v513, %v1217
        %1220 = vrot.lane.b32.xlu0 %v406, 28
        %v1221 = vpop.permute.xlu0 %1220
        %v1223 = vmul.f32 %v513, %v1221
        %1225 = vrot.lane.b32.xlu0 %v1223, 124
        %v1226 = vpop.permute.xlu0 %1225
        %v1228 = vsub.f32 %v1219, %v1226
        %1229 = vrot.lane.b32.xlu0 %v406, 24
        %v1230 = vpop.permute.xlu0 %1229
        %v1232 = vmul.f32 %v513, %v1230
        %1233 = vrot.lane.b32.xlu0 %v405, 28
        %v1234 = vpop.permute.xlu0 %1233
        %v1236 = vmul.f32 %v513, %v1234
        %1238 = vrot.lane.b32.xlu0 %v1236, 124
        %v1239 = vpop.permute.xlu0 %1238
        %v1241 = vadd.f32 %v1232, %v1239
        %1243 = vrot.lane.b32.xlu0 %v1228, 104
        %v1244 = vpop.permute.xlu0 %1243
        %1247 = vrot.lane.b32.xlu0 %v1241, 108
        %v1248 = vpop.permute.xlu0 %1247
        %v1250 = vsel %vm542, %v1244, %v1248
        %1251 = vrot.lane.b32.xlu0 %v405, 56
        %v1252 = vpop.permute.xlu0 %1251
        %v1254 = vmul.f32 %v513, %v1252
        %1255 = vrot.lane.b32.xlu0 %v406, 60
        %v1256 = vpop.permute.xlu0 %1255
        %v1258 = vmul.f32 %v513, %v1256
        %1260 = vrot.lane.b32.xlu0 %v1258, 124
        %v1261 = vpop.permute.xlu0 %1260
        %v1263 = vsub.f32 %v1254, %v1261
        %1264 = vrot.lane.b32.xlu0 %v406, 56
        %v1265 = vpop.permute.xlu0 %1264
        %v1267 = vmul.f32 %v513, %v1265
        %1268 = vrot.lane.b32.xlu0 %v405, 60
        %v1269 = vpop.permute.xlu0 %1268
        %v1271 = vmul.f32 %v513, %v1269
        %1273 = vrot.lane.b32.xlu0 %v1271, 124
        %v1274 = vpop.permute.xlu0 %1273
        %v1276 = vadd.f32 %v1267, %v1274
        %1278 = vrot.lane.b32.xlu0 %v1263, 72
        %v1279 = vpop.permute.xlu0 %1278
        %1282 = vrot.lane.b32.xlu0 %v1276, 76
        %v1283 = vpop.permute.xlu0 %1282
        %v1285 = vsel %vm542, %v1279, %v1283
        %v1287 = vsel %vm579, %v1250, 0
        %v1290 = vsel %vm579, %v1285, 0
        %1292 = vmatprep.subr.mxu0 0.0
        %1293 = vmatpush1.xpose.msra.mxu0 %v1290
        %1294 = vmatprep.subr.mxu0 0.0
        %1295 = vmatpush1.xpose.msra.mxu0 0.0
        %1296 = vmatprep.subr.mxu0 0.0
        %1297 = vmatpush1.xpose.msra.mxu0 0.0
        %1298 = vmatprep.subr.mxu0 0.0
        %1299 = vmatpush1.xpose.msra.mxu0 0.0
        %1300 = vmatprep.subr.mxu0 0.0
        %1301 = vmatpush1.xpose.msra.mxu0 0.0
        %1302 = vmatprep.subr.mxu0 0.0
        %1303 = vmatpush1.xpose.msra.mxu0 0.0
        %1304 = vmatprep.subr.mxu0 0.0
        %1305 = vmatpush1.xpose.msra.mxu0 0.0
        %1306 = vmatprep.subr.mxu0 0.0
        %1307 = vmatpush1.xpose.msra.mxu0 0.0
        %1308 = vmatprep.subr.mxu0 0.0
        %1309 = vmatpush1.xpose.msra.mxu0 0.0
        %1310 = vmatprep.subr.mxu0 0.0
        %1311 = vmatpush1.xpose.msra.mxu0 0.0
        %1312 = vmatprep.subr.mxu0 0.0
        %1313 = vmatpush1.xpose.msra.mxu0 0.0
        %1314 = vmatprep.subr.mxu0 0.0
        %1315 = vmatpush1.xpose.msra.mxu0 0.0
        %1316 = vmatprep.subr.mxu0 0.0
        %1317 = vmatpush1.xpose.msra.mxu0 0.0
        %1318 = vmatprep.subr.mxu0 0.0
        %1319 = vmatpush1.xpose.msra.mxu0 0.0
        %1320 = vmatprep.subr.mxu0 0.0
        %1321 = vmatpush1.xpose.msra.mxu0 0.0
        %1322 = vmatprep.subr.mxu0 0.0
        %1323 = vmatpush1.xpose.msra.mxu0 0.0
        %1324 = vmatprep.subr.mxu0 0.0
        %1325 = vmatpush1.xpose.msra.mxu0 0.0
        %1326 = vmatprep.subr.mxu0 0.0
        %1327 = vmatpush1.xpose.msra.mxu0 0.0
        %1328 = vmatprep.subr.mxu0 0.0
        %1329 = vmatpush1.xpose.msra.mxu0 0.0
        %1330 = vmatprep.subr.mxu0 0.0
        %1331 = vmatpush1.xpose.msra.mxu0 0.0
        %1332 = vmatprep.subr.mxu0 0.0
        %1333 = vmatpush1.xpose.msra.mxu0 0.0
        %1334 = vmatprep.subr.mxu0 0.0
        %1335 = vmatpush1.xpose.msra.mxu0 0.0
        %1336 = vmatprep.subr.mxu0 0.0
        %1337 = vmatpush1.xpose.msra.mxu0 0.0
        %1338 = vmatprep.subr.mxu0 0.0
        %1339 = vmatpush1.xpose.msra.mxu0 0.0
        %1340 = vmatprep.subr.mxu0 0.0
        %1341 = vmatpush1.xpose.msra.mxu0 0.0
        %1342 = vmatprep.subr.mxu0 0.0
        %1343 = vmatpush1.xpose.msra.mxu0 0.0
        %1344 = vmatprep.subr.mxu0 0.0
        %1345 = vmatpush1.xpose.msra.mxu0 0.0
        %1346 = vmatprep.subr.mxu0 0.0
        %1347 = vmatpush1.xpose.msra.mxu0 0.0
        %1348 = vmatprep.subr.mxu0 0.0
        %1349 = vmatpush1.xpose.msra.mxu0 0.0
        %1350 = vmatprep.subr.mxu0 0.0
        %1351 = vmatpush1.xpose.msra.mxu0 0.0
        %1352 = vmatprep.subr.mxu0 0.0
        %1353 = vmatpush1.xpose.msra.mxu0 0.0
        %1354 = vmatprep.subr.mxu0 0.0
        %1355 = vmatpush1.xpose.msra.mxu0 0.0
        %1356 = vmatprep.mubr.f32.mxu0 0.0
        %1357 = vmatmul.mubr.f32.gmra.mrb[0].mxu0 %v1287
        %v1358 = vpop.f32.mrb[0].mxu0
        %v1359 = vadd.f32 0.0, %v1358
        %v1360 = vpop.f32.mrb[0].mxu0
        %1361 = vdwg.mxu0
        %v1362 = vmul.f32 %v1359, 0.35355338
        %v1363 = vadd.f32 %v1362, %v420
        %v1364 = vsel %vm579, %v1363, -inf
        %1365 = vmax.xlane.f32.xlu0 %v1364
        %v1366 = vpop.xlane.xlu0 %1365
        %v1367 = vsub.f32 %v1363, %v1366
        %v1368 = vmul.f32 %v1367, 1.442695
        %v1369 = vpow.pop %v1368
        %v1370 = vsel %vm579, %v1369, 0.0
        %1371 = vadd.xlane.f32.xlu0 %v1370
        %v1372 = vpop.xlane.xlu0 %1371
        %v1373 = vrcp.pop %v1372
        %v1374 = vmul.f32 %v1369, %v1373
        %1375 = vrot.lane.b32.xlu0 %v513, 40
        %v1376 = vpop.permute.xlu0 %1375
        %v1379 = vsel %vm579, %v1374, 0
        %1381 = vmatprep.subr.mxu0 0.0
        %1382 = vmatpush1.msra.mxu0 %v1376
        %1383 = vmatprep.subr.mxu0 0.0
        %1384 = vmatpush1.msra.mxu0 0.0
        %1385 = vmatprep.subr.mxu0 0.0
        %1386 = vmatpush1.msra.mxu0 0.0
        %1387 = vmatprep.subr.mxu0 0.0
        %1388 = vmatpush1.msra.mxu0 0.0
        %1389 = vmatprep.subr.mxu0 0.0
        %1390 = vmatpush1.msra.mxu0 0.0
        %1391 = vmatprep.subr.mxu0 0.0
        %1392 = vmatpush1.msra.mxu0 0.0
        %1393 = vmatprep.subr.mxu0 0.0
        %1394 = vmatpush1.msra.mxu0 0.0
        %1395 = vmatprep.subr.mxu0 0.0
        %1396 = vmatpush1.msra.mxu0 0.0
        %1397 = vmatprep.subr.mxu0 0.0
        %1398 = vmatpush1.msra.mxu0 0.0
        %1399 = vmatprep.subr.mxu0 0.0
        %1400 = vmatpush1.msra.mxu0 0.0
        %1401 = vmatprep.subr.mxu0 0.0
        %1402 = vmatpush1.msra.mxu0 0.0
        %1403 = vmatprep.subr.mxu0 0.0
        %1404 = vmatpush1.msra.mxu0 0.0
        %1405 = vmatprep.subr.mxu0 0.0
        %1406 = vmatpush1.msra.mxu0 0.0
        %1407 = vmatprep.subr.mxu0 0.0
        %1408 = vmatpush1.msra.mxu0 0.0
        %1409 = vmatprep.subr.mxu0 0.0
        %1410 = vmatpush1.msra.mxu0 0.0
        %1411 = vmatprep.subr.mxu0 0.0
        %1412 = vmatpush1.msra.mxu0 0.0
        %1413 = vmatprep.subr.mxu0 0.0
        %1414 = vmatpush1.msra.mxu0 0.0
        %1415 = vmatprep.subr.mxu0 0.0
        %1416 = vmatpush1.msra.mxu0 0.0
        %1417 = vmatprep.subr.mxu0 0.0
        %1418 = vmatpush1.msra.mxu0 0.0
        %1419 = vmatprep.subr.mxu0 0.0
        %1420 = vmatpush1.msra.mxu0 0.0
        %1421 = vmatprep.subr.mxu0 0.0
        %1422 = vmatpush1.msra.mxu0 0.0
        %1423 = vmatprep.subr.mxu0 0.0
        %1424 = vmatpush1.msra.mxu0 0.0
        %1425 = vmatprep.subr.mxu0 0.0
        %1426 = vmatpush1.msra.mxu0 0.0
        %1427 = vmatprep.subr.mxu0 0.0
        %1428 = vmatpush1.msra.mxu0 0.0
        %1429 = vmatprep.subr.mxu0 0.0
        %1430 = vmatpush1.msra.mxu0 0.0
        %1431 = vmatprep.subr.mxu0 0.0
        %1432 = vmatpush1.msra.mxu0 0.0
        %1433 = vmatprep.subr.mxu0 0.0
        %1434 = vmatpush1.msra.mxu0 0.0
        %1435 = vmatprep.subr.mxu0 0.0
        %1436 = vmatpush1.msra.mxu0 0.0
        %1437 = vmatprep.subr.mxu0 0.0
        %1438 = vmatpush1.msra.mxu0 0.0
        %1439 = vmatprep.subr.mxu0 0.0
        %1440 = vmatpush1.msra.mxu0 0.0
        %1441 = vmatprep.subr.mxu0 0.0
        %1442 = vmatpush1.msra.mxu0 0.0
        %1443 = vmatprep.subr.mxu0 0.0
        %1444 = vmatpush1.msra.mxu0 0.0
        %1445 = vmatprep.mubr.f32.mxu0 0.0
        %1446 = vmatmul.mubr.f32.gmra.mrb[0].mxu0 %v1379
        %v1447 = vpop.f32.mrb[0].mxu0
        %v1448 = vadd.f32 0.0, %v1447
        %v1449 = vpop.f32.mrb[0].mxu0
        %1450 = vdwg.mxu0
        %1452 = vrot.lane.b32.xlu0 %v978, 8
        %v1453 = vpop.permute.xlu0 %1452
        %1456 = vrot.lane.b32.xlu0 %v1213, 16
        %v1457 = vpop.permute.xlu0 %1456
        %1460 = vrot.lane.b32.xlu0 %v1448, 24
        %v1461 = vpop.permute.xlu0 %1460
        %v1463 = vsel %vm579, %v743, %v1453
        %vm1464 = vcmask 130048
        %v1465 = vsel %vm1464, %v1463, %v1457
        %vm1466 = vcmask 195584
        %v1467 = vsel %vm1466, %v1465, %v1461
        %v1468 = vld [vmem:[%s6] sm:$0xff]
        %v1469 = vld [vmem:[%s6 + $0x8] sm:$0xff]
        %v1470 = vld [vmem:[%s6 + $0x10] sm:$0xff]
        %v1471 = vld [vmem:[%s6 + $0x18] sm:$0xff]
        %v1473 = vsel %vm423, %v1467, 0
        %1475 = vmatprep.subr.mxu0 0.0
        %1476 = vmatpush1.msra.mxu0 %v1468
        %1477 = vmatprep.subr.mxu0 0.0
        %1478 = vmatpush1.msra.mxu0 %v1469
        %1479 = vmatprep.subr.mxu0 0.0
        %1480 = vmatpush1.msra.mxu0 %v1470
        %1481 = vmatprep.subr.mxu0 0.0
        %1482 = vmatpush1.msra.mxu0 %v1471
        %1483 = vmatprep.subr.mxu0 0.0
        %1484 = vmatpush1.msra.mxu0 0.0
        %1485 = vmatprep.subr.mxu0 0.0
        %1486 = vmatpush1.msra.mxu0 0.0
        %1487 = vmatprep.subr.mxu0 0.0
        %1488 = vmatpush1.msra.mxu0 0.0
        %1489 = vmatprep.subr.mxu0 0.0
        %1490 = vmatpush1.msra.mxu0 0.0
        %1491 = vmatprep.subr.mxu0 0.0
        %1492 = vmatpush1.msra.mxu0 0.0
        %1493 = vmatprep.subr.mxu0 0.0
        %1494 = vmatpush1.msra.mxu0 0.0
        %1495 = vmatprep.subr.mxu0 0.0
        %1496 = vmatpush1.msra.mxu0 0.0
        %1497 = vmatprep.subr.mxu0 0.0
        %1498 = vmatpush1.msra.mxu0 0.0
        %1499 = vmatprep.subr.mxu0 0.0
        %1500 = vmatpush1.msra.mxu0 0.0
        %1501 = vmatprep.subr.mxu0 0.0
        %1502 = vmatpush1.msra.mxu0 0.0
        %1503 = vmatprep.subr.mxu0 0.0
        %1504 = vmatpush1.msra.mxu0 0.0
        %1505 = vmatprep.subr.mxu0 0.0
        %1506 = vmatpush1.msra.mxu0 0.0
        %1507 = vmatprep.subr.mxu0 0.0
        %1508 = vmatpush1.msra.mxu0 0.0
        %1509 = vmatprep.subr.mxu0 0.0
        %1510 = vmatpush1.msra.mxu0 0.0
        %1511 = vmatprep.subr.mxu0 0.0
        %1512 = vmatpush1.msra.mxu0 0.0
        %1513 = vmatprep.subr.mxu0 0.0
        %1514 = vmatpush1.msra.mxu0 0.0
        %1515 = vmatprep.subr.mxu0 0.0
        %1516 = vmatpush1.msra.mxu0 0.0
        %1517 = vmatprep.subr.mxu0 0.0
        %1518 = vmatpush1.msra.mxu0 0.0
        %1519 = vmatprep.subr.mxu0 0.0
        %1520 = vmatpush1.msra.mxu0 0.0
        %1521 = vmatprep.subr.mxu0 0.0
        %1522 = vmatpush1.msra.mxu0 0.0
        %1523 = vmatprep.subr.mxu0 0.0
        %1524 = vmatpush1.msra.mxu0 0.0
        %1525 = vmatprep.subr.mxu0 0.0
        %1526 = vmatpush1.msra.mxu0 0.0
        %1527 = vmatprep.subr.mxu0 0.0
        %1528 = vmatpush1.msra.mxu0 0.0
        %1529 = vmatprep.subr.mxu0 0.0
        %1530 = vmatpush1.msra.mxu0 0.0
        %1531 = vmatprep.subr.mxu0 0.0
        %1532 = vmatpush1.msra.mxu0 0.0
        %1533 = vmatprep.subr.mxu0 0.0
        %1534 = vmatpush1.msra.mxu0 0.0
        %1535 = vmatprep.subr.mxu0 0.0
        %1536 = vmatpush1.msra.mxu0 0.0
        %1537 = vmatprep.subr.mxu0 0.0
        %1538 = vmatpush1.msra.mxu0 0.0
        %1539 = vmatprep.mubr.f32.mxu0 0.0
        %1540 = vmatmul.mubr.f32.gmra.mrb[0].mxu0 %v1473
        %v1541 = vpop.f32.mrb[0].mxu0
        %v1542 = vadd.f32 0.0, %v1541
        %v1543 = vpop.f32.mrb[0].mxu0
        %1544 = vdwg.mxu0
        %v1545 = vadd.f32 %v403, %v1542
        %v1546 = vld [vmem:[%s7] sm:$0x1]
        %v1547 = vmul.f32 %v1545, %v1545
        %v1548 = vsel %vm423, %v1547, 0.0
        %1549 = vadd.xlane.f32.xlu0 %v1548
        %v1550 = vpop.xlane.xlu0 %1549
        %v1551 = vmul.f32 %v1550, %v427
        %v1552 = vadd.f32 %v1551, 1e-06
        %v1553 = vrsqrt.pop %v1552
        %v1554 = vmul.f32 %v1545, %v1553
        %v1556 = vlaneseq
        %v1557 = vshrl.u32 %v1556, 7
        %v1558 = vsub.s32 0, %v1557
        %v1559 = vrot.slane %v1546, %v1558
        %v1561 = vmul.f32 %v1554, %v1559
        %v1562 = vld [vmem:[%s8] sm:$0xff]
        %v1563 = vld [vmem:[%s8 + $0x8] sm:$0xff]
        %v1564 = vld [vmem:[%s8 + $0x10] sm:$0xff]
        %v1565 = vld [vmem:[%s8 + $0x18] sm:$0xff]
        %v1567 = vsel %vm423, %v1561, 0
        %1569 = vmatprep.subr.mxu0 0.0
        %1570 = vmatpush1.msra.mxu0 %v1562
        %1571 = vmatprep.subr.mxu0 0.0
        %1572 = vmatpush1.msra.mxu0 %v1563
        %1573 = vmatprep.subr.mxu0 0.0
        %1574 = vmatpush1.msra.mxu0 %v1564
        %1575 = vmatprep.subr.mxu0 0.0
        %1576 = vmatpush1.msra.mxu0 %v1565
        %1577 = vmatprep.subr.mxu0 0.0
        %1578 = vmatpush1.msra.mxu0 0.0
        %1579 = vmatprep.subr.mxu0 0.0
        %1580 = vmatpush1.msra.mxu0 0.0
        %1581 = vmatprep.subr.mxu0 0.0
        %1582 = vmatpush1.msra.mxu0 0.0
        %1583 = vmatprep.subr.mxu0 0.0
        %1584 = vmatpush1.msra.mxu0 0.0
        %1585 = vmatprep.subr.mxu0 0.0
        %1586 = vmatpush1.msra.mxu0 0.0
        %1587 = vmatprep.subr.mxu0 0.0
        %1588 = vmatpush1.msra.mxu0 0.0
        %1589 = vmatprep.subr.mxu0 0.0
        %1590 = vmatpush1.msra.mxu0 0.0
        %1591 = vmatprep.subr.mxu0 0.0
        %1592 = vmatpush1.msra.mxu0 0.0
        %1593 = vmatprep.subr.mxu0 0.0
        %1594 = vmatpush1.msra.mxu0 0.0
        %1595 = vmatprep.subr.mxu0 0.0
        %1596 = vmatpush1.msra.mxu0 0.0
        %1597 = vmatprep.subr.mxu0 0.0
        %1598 = vmatpush1.msra.mxu0 0.0
        %1599 = vmatprep.subr.mxu0 0.0
        %1600 = vmatpush1.msra.mxu0 0.0
        %1601 = vmatprep.subr.mxu0 0.0
        %1602 = vmatpush1.msra.mxu0 0.0
        %1603 = vmatprep.subr.mxu0 0.0
        %1604 = vmatpush1.msra.mxu0 0.0
        %1605 = vmatprep.subr.mxu0 0.0
        %1606 = vmatpush1.msra.mxu0 0.0
        %1607 = vmatprep.subr.mxu0 0.0
        %1608 = vmatpush1.msra.mxu0 0.0
        %1609 = vmatprep.subr.mxu0 0.0
        %1610 = vmatpush1.msra.mxu0 0.0
        %1611 = vmatprep.subr.mxu0 0.0
        %1612 = vmatpush1.msra.mxu0 0.0
        %1613 = vmatprep.subr.mxu0 0.0
        %1614 = vmatpush1.msra.mxu0 0.0
        %1615 = vmatprep.subr.mxu0 0.0
        %1616 = vmatpush1.msra.mxu0 0.0
        %1617 = vmatprep.subr.mxu0 0.0
        %1618 = vmatpush1.msra.mxu0 0.0
        %1619 = vmatprep.subr.mxu0 0.0
        %1620 = vmatpush1.msra.mxu0 0.0
        %1621 = vmatprep.subr.mxu0 0.0
        %1622 = vmatpush1.msra.mxu0 0.0
        %1623 = vmatprep.subr.mxu0 0.0
        %1624 = vmatpush1.msra.mxu0 0.0
        %1625 = vmatprep.subr.mxu0 0.0
        %1626 = vmatpush1.msra.mxu0 0.0
        %1627 = vmatprep.subr.mxu0 0.0
        %1628 = vmatpush1.msra.mxu0 0.0
        %1629 = vmatprep.subr.mxu0 0.0
        %1630 = vmatpush1.msra.mxu0 0.0
        %1631 = vmatprep.subr.mxu0 0.0
        %1632 = vmatpush1.msra.mxu0 0.0
        %1633 = vmatprep.mubr.f32.mxu0 0.0
        %1634 = vmatmul.mubr.f32.gmra.mrb[0].mxu0 %v1567
        %v1635 = vpop.f32.mrb[0].mxu0
        %v1636 = vadd.f32 0.0, %v1635
        %v1637 = vpop.f32.mrb[0].mxu0
        %1638 = vdwg.mxu0
        %v1639 = vxor.u32 %v1636, 2147483648
        %v1640 = vmul.f32 %v1639, 1.442695
        %v1641 = vpow.pop %v1640
        %v1642 = vadd.f32 %v1641, 1.0
        %v1643 = vrcp.pop %v1642
        %v1644 = vmul.f32 1.0, %v1643
        %v1645 = vmul.f32 %v1636, %v1644
        %1647 = vrot.lane.b32.xlu0 %v1636, 64
        %v1648 = vpop.permute.xlu0 %1647
        %v1650 = vmul.f32 %v1645, %v1648
        %v1651 = vld [vmem:[%s9] sm:$0xff]
        %v1652 = vld [vmem:[%s9 + $0x8] sm:$0xff]
        %v1653 = vld [vmem:[%s9 + $0x10] sm:$0xff]
        %v1654 = vld [vmem:[%s9 + $0x18] sm:$0xff]
        %v1655 = vld [vmem:[%s9 + $0x20] sm:$0xff]
        %v1656 = vld [vmem:[%s9 + $0x28] sm:$0xff]
        %v1657 = vld [vmem:[%s9 + $0x30] sm:$0xff]
        %v1658 = vld [vmem:[%s9 + $0x38] sm:$0xff]
        %vm1659 = vcmask 523264
        %v1661 = vsel %vm1659, %v1650, 0
        %1663 = vmatprep.subr.mxu0 0.0
        %1664 = vmatpush1.msra.mxu0 %v1651
        %1665 = vmatprep.subr.mxu0 0.0
        %1666 = vmatpush1.msra.mxu0 %v1652
        %1667 = vmatprep.subr.mxu0 0.0
        %1668 = vmatpush1.msra.mxu0 %v1653
        %1669 = vmatprep.subr.mxu0 0.0
        %1670 = vmatpush1.msra.mxu0 %v1654
        %1671 = vmatprep.subr.mxu0 0.0
        %1672 = vmatpush1.msra.mxu0 %v1655
        %1673 = vmatprep.subr.mxu0 0.0
        %1674 = vmatpush1.msra.mxu0 %v1656
        %1675 = vmatprep.subr.mxu0 0.0
        %1676 = vmatpush1.msra.mxu0 %v1657
        %1677 = vmatprep.subr.mxu0 0.0
        %1678 = vmatpush1.msra.mxu0 %v1658
        %1679 = vmatprep.subr.mxu0 0.0
        %1680 = vmatpush1.msra.mxu0 0.0
        %1681 = vmatprep.subr.mxu0 0.0
        %1682 = vmatpush1.msra.mxu0 0.0
        %1683 = vmatprep.subr.mxu0 0.0
        %1684 = vmatpush1.msra.mxu0 0.0
        %1685 = vmatprep.subr.mxu0 0.0
        %1686 = vmatpush1.msra.mxu0 0.0
        %1687 = vmatprep.subr.mxu0 0.0
        %1688 = vmatpush1.msra.mxu0 0.0
        %1689 = vmatprep.subr.mxu0 0.0
        %1690 = vmatpush1.msra.mxu0 0.0
        %1691 = vmatprep.subr.mxu0 0.0
        %1692 = vmatpush1.msra.mxu0 0.0
        %1693 = vmatprep.subr.mxu0 0.0
        %1694 = vmatpush1.msra.mxu0 0.0
        %1695 = vmatprep.subr.mxu0 0.0
        %1696 = vmatpush1.msra.mxu0 0.0
        %1697 = vmatprep.subr.mxu0 0.0
        %1698 = vmatpush1.msra.mxu0 0.0
        %1699 = vmatprep.subr.mxu0 0.0
        %1700 = vmatpush1.msra.mxu0 0.0
        %1701 = vmatprep.subr.mxu0 0.0
        %1702 = vmatpush1.msra.mxu0 0.0
        %1703 = vmatprep.subr.mxu0 0.0
        %1704 = vmatpush1.msra.mxu0 0.0
        %1705 = vmatprep.subr.mxu0 0.0
        %1706 = vmatpush1.msra.mxu0 0.0
        %1707 = vmatprep.subr.mxu0 0.0
        %1708 = vmatpush1.msra.mxu0 0.0
        %1709 = vmatprep.subr.mxu0 0.0
        %1710 = vmatpush1.msra.mxu0 0.0
        %1711 = vmatprep.subr.mxu0 0.0
        %1712 = vmatpush1.msra.mxu0 0.0
        %1713 = vmatprep.subr.mxu0 0.0
        %1714 = vmatpush1.msra.mxu0 0.0
        %1715 = vmatprep.subr.mxu0 0.0
        %1716 = vmatpush1.msra.mxu0 0.0
        %1717 = vmatprep.subr.mxu0 0.0
        %1718 = vmatpush1.msra.mxu0 0.0
        %1719 = vmatprep.subr.mxu0 0.0
        %1720 = vmatpush1.msra.mxu0 0.0
        %1721 = vmatprep.subr.mxu0 0.0
        %1722 = vmatpush1.msra.mxu0 0.0
        %1723 = vmatprep.subr.mxu0 0.0
        %1724 = vmatpush1.msra.mxu0 0.0
        %1725 = vmatprep.subr.mxu0 0.0
        %1726 = vmatpush1.msra.mxu0 0.0
        %1727 = vmatprep.mubr.f32.mxu0 0.0
        %1728 = vmatmul.mubr.f32.gmra.mrb[0].mxu0 %v1661
        %v1729 = vpop.f32.mrb[0].mxu0
        %v1730 = vadd.f32 0.0, %v1729
        %v1731 = vpop.f32.mrb[0].mxu0
        %1732 = vdwg.mxu0
        %v1733 = vadd.f32 %v1545, %v1730
        %1734 = vst.msk [vmem:[%s387] sm:$0xff] %vm423, %v1733
        %s1735 = sand.u32 %s262, 1
        %s1736 = scalar_lea.sflag [#allocation3], %s1735
        %s1737 = sand.u32 %s262, 1
        %s1738 = smul.addr %s1737, 8
        %s1739 = scalar_lea.vmem [#allocation2], %s1738
        // Predicated region
        $region61: #{tpu_custom_call.1} parent=59 // pred_check
          %p1740 = pneg %p272
        $region62: #{tpu_custom_call.1} parent=59 // pred_check_branch
          %1742 = sbr.rel (%p1740) target = $region64
        $region63: #{tpu_custom_call.1} parent=59 // pred_region
          %s1744 = ssub.s32 128, 128
          %1745 = vsyncadd %s1736, %s1744
          %s1746 = smul.addr %s24, 128
          %s1747 = scalar_lea.hbm %s10, %s1746
          %s1749 = sshll.u32 %s1739, 4
          %s1750 = int_to_ptr.vmem [resolvable:$true] %s1749
          %1752 = dma.vmem_to_hbm [thread:$0]  %s1750, 128, %s1747, %s1736
        $region64: #{tpu_custom_call.1} parent=59 // pred_fallthru
          _
      $region60: #{tpu_custom_call.1} parent=5 // pred_fallthru
        _
      %p1753 = scmp.le.s32.totalorder 2, %s19
      // Predicated region
      $region65: #{tpu_custom_call.1} parent=5 // pred_check
        %p1754 = pneg %p1753
      $region66: #{tpu_custom_call.1} parent=5 // pred_check_branch
        %1756 = sbr.rel (%p1754) target = $region68
      $region67: #{tpu_custom_call.1} parent=5 // pred_region
        %s1757 = ssub.s32 %s19, 2
        // Predicated region
        $region69: #{tpu_custom_call.1} parent=67 // pred_check
          %p1758 = pneg %p278
        $region70: #{tpu_custom_call.1} parent=67 // pred_check_branch
          %1760 = sbr.rel (%p1758) target = $region72
        $region71: #{tpu_custom_call.1} parent=67 // pred_region
          %s1761 = sand.u32 %s263, 1
          %s1762 = scalar_lea.sflag [#allocation3], %s1761
          %s1763 = sand.u32 %s263, 1
          %s1764 = smul.addr %s1763, 8
          %s1765 = scalar_lea.vmem [#allocation2], %s1764
          %1766 = dma.done %s1762, 128
        $region72: #{tpu_custom_call.1} parent=67 // pred_fallthru
          _
      $region68: #{tpu_custom_call.1} parent=5 // pred_fallthru
        _
    $region6: #{tpu_custom_call.1} parent=1 // loop_footer
      %s23 = sadd.s32 1, %s19
    $region7: #{tpu_custom_call.1} parent=1 // loop_footer_branch
      %18 = sbr.rel target = $region3
    $region8: #{tpu_custom_call.1} parent=1 // loop_exit
      _
    %1767 = vsyncpa [#allocation3], 1
    %s1768 = scalar_lea.sflag [#allocation3], 1
    %1769 = vsyncpa %s1768, 1

</llo_original>
